<compile_context>
chip_gen: v6e
topology: v6e:2x2x1
jax: 0.10.0
libtpu: 0.0.40
codegen_flags: <defaults>
</compile_context>

<pallas_src>
import functools

import jax
import jax.numpy as jnp
import numpy as np
from jax.experimental import pallas as pl
from jax.experimental.pallas import tpu as pltpu

BN_EPS = 1e-5


# ------------------------------ small helpers ------------------------------- #
def _round_up(x, m):
    return (x + m - 1) // m * m


def _padded_bytes(shape, itemsize):
    """VMEM footprint of a block after (8, 128) tiling of the last two dims."""
    s = list(shape)
    s[-1] = _round_up(int(s[-1]), 128)
    if len(s) >= 2:
        s[-2] = _round_up(int(s[-2]), 8)
    n = itemsize
    for d in s:
        n *= int(d)
    return n


def _vmem_capacity_bytes():
    """Per-core VMEM capacity; conservative fallback = v7x's 64 MiB/TC."""
    try:
        cap = getattr(pltpu.get_tpu_info(), "vmem_capacity_bytes", None)
        if cap:
            return int(cap)
    except Exception:
        pass
    return 64 * 1024 * 1024


# ------------------------- lowered conv3x3 weights --------------------------- #
def lower_conv3x3_weights(w_oihw, w, dtype):
    """Lower a 3x3 / padding=1 conv (OIHW weights) acting on a lane-flattened
    channels-last row (length (W+2)*Cin, one zero pixel each side) into three
    dense per-dy matrices M[dy] of shape ((W+2)*Cin, W*Cout) such that

        y[r, :] = sum_dy  x_pad[r + dy, :] @ M[dy]      (row length W*Cout)

    i.e. the conv becomes three lane-dense MXU matmuls with no im2col
    relayout and no masked stores.  Size is O(W^2*Cin*Cout): the right trade
    at small channel counts (here (W+2)*Cin x W*Cout = 136..272 x 128).
    """
    cout, cin = int(w_oihw.shape[0]), int(w_oihw.shape[1])
    k_dim, n_dim = (w + 2) * cin, w * cout
    c = jnp.arange(w)
    ci = jnp.arange(cin)
    co = jnp.arange(cout)
    cols = c[:, None, None] * cout + co[None, None, :]                 # (W,1,Cout)
    mats = []
    for dy in range(3):
        m = jnp.zeros((k_dim, n_dim), jnp.float32)
        for dx in range(3):
            rows = (c[:, None, None] + dx) * cin + ci[None, :, None]   # (W,Cin,1)
            blk = jnp.broadcast_to(w_oihw[:, :, dy, dx].T[None], (w, cin, cout))
            m = m.at[rows, cols].add(blk)
        mats.append(m)
    return jnp.stack(mats).astype(dtype)                               # (3, K, N)


# ------------------------------ Pallas kernels ------------------------------- #
def _make_conv_stats_kernel(num_src, h, w, cins, cout, apply_in_act, conv_dtype):
    """conv3x3(pad=1) [optionally preceded by the PREVIOUS stage's folded
    BatchNorm + ReLU, fused into the load] + per-image partial BN statistics.

    Ref layout (all lane-dense, one whole image per grid step):
      x_refs[s] : (1, H, W*Cin_s)  f32        input source s
      m_refs[s] : (3, (W+2)*Cin_s, W*Cout)    lowered conv weights (conv_dtype)
      sb_refs[s]: (2, W*Cin_s)     f32        [scale; bias] of prev-stage BN
      y_ref     : (1, H, W*Cout)   f32        raw conv output (pre-BN)
      s_ref     : (1, 2, W*Cout)   f32        per-image [sum; sum-of-squares]
    """
    def kernel(*refs):
        x_refs = refs[:num_src]
        m_refs = refs[num_src:2 * num_src]
        off = 2 * num_src
        sb_refs = refs[off:off + num_src] if apply_in_act else ()
        off += num_src if apply_in_act else 0
        y_ref, s_ref = refs[off], refs[off + 1]

        acc = jnp.zeros((h, w * cout), jnp.float32)
        for s in range(num_src):
            cin = cins[s]
            # Lane-dense tile: only ~H*W*Cin/1024 vregs, so materializing the
            # whole value is cheap (the old NHWC tile needed ~90 vregs).
            x = x_refs[s][0]                                   # (H, W*Cin) f32
            if apply_in_act:
                # Previous stage's BN (folded scale/bias) + ReLU, fused into
                # this load: the normalized activation never touches HBM.
                x = jnp.maximum(x * sb_refs[s][0:1, :] + sb_refs[s][1:2, :], 0.0)
            # conv padding=1, applied in-register on the post-activation value.
            zlane = jnp.zeros((h, cin), jnp.float32)
            x = jnp.concatenate([zlane, x, zlane], axis=1)     # (H, (W+2)*Cin)
            zrow = jnp.zeros((1, (w + 2) * cin), jnp.float32)
            x = jnp.concatenate([zrow, x, zrow], axis=0)       # (H+2, (W+2)*Cin)
            x = x.astype(conv_dtype)
            for dy in range(3):                                # 3 MXU matmuls
                acc += jnp.dot(x[dy:dy + h, :], m_refs[s][dy],
                               preferred_element_type=jnp.float32)
        y_ref[0] = acc                                         # lane-dense store
        # Partial BN statistics (row reduction only; the per-channel fold over
        # the W lane-groups happens once in the wrapper).
        s_ref[0, 0:1, :] = jnp.sum(acc, axis=0, keepdims=True)
        s_ref[0, 1:2, :] = jnp.sum(acc * acc, axis=0, keepdims=True)
    return kernel


def bn_relu_kernel(y_ref, sb_ref, o_ref):
    """Final BatchNorm affine (per-channel scale/bias tiled across W) + ReLU."""
    o_ref[0] = jnp.maximum(y_ref[0] * sb_ref[0:1, :] + sb_ref[1:2, :], 0.0)


# ------------------------------ stage wrappers ------------------------------- #
def conv_bn_stage(xs, cins, cout, ms, in_sb, gamma, beta, *, apply_in_act,
                  conv_dtype):
    """[prev BN+ReLU fused]? -> Conv3x3(pad=1, no bias) -> global batch stats.

    Returns (raw conv output (N, H, W*Cout) f32, folded BN scale, folded bias)
    so the normalization is applied lazily by the NEXT stage / final pass.
    """
    num_src = len(xs)
    n, h, _ = xs[0].shape
    w = xs[0].shape[2] // cins[0]

    # ---- VMEM budget with (8,128)-padded footprints (v7x: 64 MiB / core) ---- #
    f32b = jnp.dtype(jnp.float32).itemsize
    wdtb = jnp.dtype(conv_dtype).itemsize
    needed = 0
    for s in range(num_src):
        needed += 2 * _padded_bytes((1, h, w * cins[s]), f32b)      # input (2-buf)
        needed += 2 * _padded_bytes(ms[s].shape, wdtb)              # resident weights
        if apply_in_act:
            needed += 2 * _padded_bytes((2, w * cins[s]), f32b)     # resident sb
    needed += 2 * _padded_bytes((1, h, w * cout), f32b)             # conv out (2-buf)
    needed += 2 * _padded_bytes((1, 2, w * cout), f32b)             # stats out
    budget = _vmem_capacity_bytes() * 3 // 4
    if needed > budget:
        # TODO(synk): row-tile H with a 1-row halo (pl.ANY input + manual
        # pltpu.make_async_copy of the halo'd window) for images too large for
        # whole-image VMEM residency; not needed at these shapes.
        raise NotImplementedError("image too large for whole-image VMEM tiling")
    vmem_limit = min(max(needed + (4 << 20), 16 << 20), budget)

    compiler_params = pltpu.CompilerParams(
        dimension_semantics=("parallel",),      # N images -> both TCs on v7x
        vmem_limit_bytes=vmem_limit)

    kernel = _make_conv_stats_kernel(num_src, h, w, tuple(cins), cout,
                                     apply_in_act, conv_dtype)

    inputs, in_specs = [], []
    for s in range(num_src):
        inputs.append(xs[s])
        in_specs.append(pl.BlockSpec((1, h, w * cins[s]), lambda i: (i, 0, 0)))
    for s in range(num_src):
        inputs.append(ms[s])
        in_specs.append(pl.BlockSpec(ms[s].shape, lambda i: (0, 0, 0)))   # resident
    if apply_in_act:
        for s in range(num_src):
            inputs.append(in_sb[s])
            in_specs.append(pl.BlockSpec(in_sb[s].shape, lambda i: (0, 0)))

    conv_raw, stats = pl.pallas_call(
        kernel,
        out_shape=(jax.ShapeDtypeStruct((n, h, w * cout), jnp.float32),
                   jax.ShapeDtypeStruct((n, 2, w * cout), jnp.float32)),
        grid=(n,),
        in_specs=in_specs,
        out_specs=(pl.BlockSpec((1, h, w * cout), lambda i: (i, 0, 0)),
                   pl.BlockSpec((1, 2, w * cout), lambda i: (i, 0, 0))),
        compiler_params=compiler_params,
    )(*inputs)

    # Exact training-mode BatchNorm2d statistics over the full (N, H, W) batch.
    cnt = float(n * h * w)
    tot = stats.sum(axis=0).reshape(2, w, cout).sum(axis=1)      # (2, Cout)
    mean = tot[0] / cnt
    var = jnp.maximum(tot[1] / cnt - mean * mean, 0.0)           # biased variance
    scale = gamma * jax.lax.rsqrt(var + BN_EPS)
    bias = beta - mean * scale
    return conv_raw, scale, bias


def bn_relu_apply(y_lf, sb):
    """Apply the folded final BatchNorm + ReLU, lane-dense, one image per step."""
    n, h, wl = y_lf.shape
    f32b = 4
    needed = 4 * _padded_bytes((1, h, wl), f32b) + 2 * _padded_bytes(sb.shape, f32b)
    vmem_limit = min(max(needed + (4 << 20), 16 << 20),
                     _vmem_capacity_bytes() * 3 // 4)
    return pl.pallas_call(
        bn_relu_kernel,
        out_shape=jax.ShapeDtypeStruct((n, h, wl), jnp.float32),
        grid=(n,),
        in_specs=[pl.BlockSpec((1, h, wl), lambda i: (i, 0, 0)),
                  pl.BlockSpec(sb.shape, lambda i: (0, 0))],
        out_specs=pl.BlockSpec((1, h, wl), lambda i: (i, 0, 0)),
        compiler_params=pltpu.CompilerParams(
            dimension_semantics=("parallel",),
            vmem_limit_bytes=vmem_limit),
    )(y_lf, sb)


# -------------------------------- JAX glue ----------------------------------- #
def upsample_bilinear_x2_align_corners_nhwc(x):
    """torch.nn.Upsample(scale_factor=2, mode='bilinear', align_corners=True).
    Gather-based; kept as XLA glue (no clean blocked Pallas access pattern)."""
    n, h, w, c = x.shape
    ho, wo = 2 * h, 2 * w
    ys = jnp.arange(ho, dtype=jnp.float32) * (h - 1) / (ho - 1)
    xs = jnp.arange(wo, dtype=jnp.float32) * (w - 1) / (wo - 1)
    y0 = jnp.floor(ys).astype(jnp.int32)
    x0 = jnp.floor(xs).astype(jnp.int32)
    y1 = jnp.minimum(y0 + 1, h - 1)
    x1 = jnp.minimum(x0 + 1, w - 1)
    wy = (ys - y0.astype(jnp.float32))[None, :, None, None]
    wx = (xs - x0.astype(jnp.float32))[None, None, :, None]
    top = x[:, y0, :, :]
    bot = x[:, y1, :, :]
    v00 = top[:, :, x0, :]
    v01 = top[:, :, x1, :]
    v10 = bot[:, :, x0, :]
    v11 = bot[:, :, x1, :]
    return (v00 * (1 - wy) * (1 - wx) + v01 * (1 - wy) * wx
            + v10 * wy * (1 - wx) + v11 * wy * wx)


def up_forward(x1, x2, params, *, conv_dtype=jnp.float32):
    """Up.forward(x1, x2); NCHW in / NCHW out (PyTorch convention)."""
    wt1, g1, b1, wt2, g2, b2 = params      # wt*: OIHW 3x3 conv weights
    # One NCHW -> channels-last transpose per input; everything downstream
    # stays in the lane-flattened (N, H, W*C) layout (free reshape of NHWC).
    x1_nhwc = jnp.transpose(x1, (0, 2, 3, 1))
    x2_nhwc = jnp.transpose(x2, (0, 2, 3, 1))
    x1u = upsample_bilinear_x2_align_corners_nhwc(x1_nhwc)
    diff_y = x2_nhwc.shape[1] - x1u.shape[1]
    diff_x = x2_nhwc.shape[2] - x1u.shape[2]
    x1u = jnp.pad(x1u, ((0, 0),
                        (diff_y // 2, diff_y - diff_y // 2),
                        (diff_x // 2, diff_x - diff_x // 2),
                        (0, 0)))
    n, hh, ww, c_skip = x2_nhwc.shape
    c_up = x1u.shape[-1]
    mid, cout = int(wt1.shape[0]), int(wt2.shape[0])

    # torch.cat([x2, x1u], dim=1) is never materialized in HBM: the two sources
    # are fed separately; their channel placement lives in the lowered weights.
    x2_lf = x2_nhwc.reshape(n, hh, ww * c_skip)
    x1u_lf = x1u.reshape(n, hh, ww * c_up)

    m_skip = lower_conv3x3_weights(wt1[:, :c_skip], ww, conv_dtype)
    m_up = lower_conv3x3_weights(wt1[:, c_skip:], ww, conv_dtype)
    m2 = lower_conv3x3_weights(wt2, ww, conv_dtype)

    # Stage 1: conv1 raw output + its global batch statistics.
    conv1_raw, s1, t1 = conv_bn_stage(
        [x2_lf, x1u_lf], [c_skip, c_up], mid, [m_skip, m_up], None, g1, b1,
        apply_in_act=False, conv_dtype=conv_dtype)

    # Stage 2: BN1 + ReLU fused into conv2's load; conv2 raw output + stats.
    sb1 = jnp.stack([jnp.tile(s1, ww), jnp.tile(t1, ww)])        # (2, W*mid)
    conv2_raw, s2, t2 = conv_bn_stage(
        [conv1_raw], [mid], cout, [m2], [sb1], g2, b2,
        apply_in_act=True, conv_dtype=conv_dtype)

    # Final BN2 + ReLU.
    sb2 = jnp.stack([jnp.tile(s2, ww), jnp.tile(t2, ww)])        # (2, W*cout)
    y_lf = bn_relu_apply(conv2_raw, sb2)
    y = y_lf.reshape(n, hh, ww, cout)
    return jnp.transpose(y, (0, 3, 1, 2))


# ---------------------------- parameter creation ----------------------------- #
def init_params(key, in_channels, out_channels):
    mid = in_channels // 2
    k1, k2, k3, k4, k5, k6 = jax.random.split(key, 6)
    wt1 = 0.1 * jax.random.normal(k1, (mid, in_channels, 3, 3), jnp.float32)
    wt2 = 0.1 * jax.random.normal(k2, (out_channels, mid, 3, 3), jnp.float32)
    g1 = 1.0 + 0.1 * jax.random.normal(k3, (mid,), jnp.float32)
    b1 = 0.1 * jax.random.normal(k4, (mid,), jnp.float32)
    g2 = 1.0 + 0.1 * jax.random.normal(k5, (out_channels,), jnp.float32)
    b2 = 0.1 * jax.random.normal(k6, (out_channels,), jnp.float32)
    return (wt1, g1, b1, wt2, g2, b2)


# ------------------------------- pure-JAX ref -------------------------------- #
def _conv3x3_ref(x_nchw, w_oihw):
    return jax.lax.conv_general_dilated(
        x_nchw, w_oihw, window_strides=(1, 1), padding=((1, 1), (1, 1)),
        dimension_numbers=('NCHW', 'OIHW', 'NCHW'))


def _bn_relu_ref(x, g, b):
    mean = jnp.mean(x, axis=(0, 2, 3), keepdims=True)
    var = jnp.mean((x - mean) ** 2, axis=(0, 2, 3), keepdims=True)
    y = (x - mean) * jax.lax.rsqrt(var + BN_EPS)
    y = y * g.reshape(1, -1, 1, 1) + b.reshape(1, -1, 1, 1)
    return jnp.maximum(y, 0.0)


def up_forward_ref(x1, x2, w1_oihw, w2_oihw, g1, b1, g2, b2):
    x1u = jnp.transpose(
        upsample_bilinear_x2_align_corners_nhwc(jnp.transpose(x1, (0, 2, 3, 1))),
        (0, 3, 1, 2))
    diff_y = x2.shape[2] - x1u.shape[2]
    diff_x = x2.shape[3] - x1u.shape[3]
    x1u = jnp.pad(x1u, ((0, 0), (0, 0),
                        (diff_y // 2, diff_y - diff_y // 2),
                        (diff_x // 2, diff_x - diff_x // 2)))
    x = jnp.concatenate([x2, x1u], axis=1)
    h = _bn_relu_ref(_conv3x3_ref(x, w1_oihw), g1, b1)
    return _bn_relu_ref(_conv3x3_ref(h, w2_oihw), g2, b2)


# ----------------------------------- main ------------------------------------ #
if __name__ == "__main__":
    in_channels, out_channels = 8, 4   # concat channels = 4 (skip) + 4 (upsampled)
    key = jax.random.PRNGKey(0)
    kp, kx1, kx2 = jax.random.split(key, 3)

    params = init_params(kp, in_channels, out_channels)
    wt1, g1, b1, wt2, g2, b2 = params

    x1 = jax.random.normal(kx1, (2, 4, 16, 16), jnp.float32)   # decoder feature
    x2 = jax.random.normal(kx2, (2, 4, 32, 32), jnp.float32)   # skip connection

    ref = jax.block_until_ready(
        up_forward_ref(x1, x2, wt1, wt2, g1, b1, g2, b2))

    # f32 MXU-operand path: strict match against the pure-JAX reference.
    up_f32 = jax.jit(functools.partial(up_forward, conv_dtype=jnp.float32))
    out = jax.block_until_ready(up_f32(x1, x2, params))
    assert out.shape == (2, out_channels, 32, 32), out.shape
    np.testing.assert_allclose(np.asarray(out), np.asarray(ref),
                               rtol=1e-4, atol=1e-4)

    # bf16 MXU-operand path (f32 accumulation / BN math): looser tolerance.
    up_bf16 = jax.jit(functools.partial(up_forward, conv_dtype=jnp.bfloat16))
    out_bf16 = jax.block_until_ready(up_bf16(x1, x2, params))
    np.testing.assert_allclose(np.asarray(out_bf16), np.asarray(ref),
                               rtol=5e-2, atol=5e-2)

    print("KERNEL_OK")
</pallas_src>

<mosaic_0001>
module attributes {stable_mosaic.version = 11 : i64} {
  func.func private @main(%arg0: i32) attributes {dimension_semantics = [#tpu.dimension_semantics<core_parallel>], iteration_bounds = array<i64: 2>, tpu.core_type = #tpu.core_type<sc_scalar_subcore>, window_params = []} {
    return
  }
}

module attributes {stable_mosaic.version = 11 : i64} {
  func.func private @main(%arg0: i32) attributes {dimension_semantics = [#tpu.dimension_semantics<core_parallel>], iteration_bounds = array<i64: 2>, tpu.core_type = #tpu.core_type<sc_scalar_subcore>, window_params = []} {
    return
  }
}

module attributes {stable_mosaic.version = 11 : i64} {
  func.func @kernel(%arg0: i32, %arg1: memref<1x32x128xf32, #tpu.memory_space<vmem>>, %arg2: memref<1x32x128xf32, #tpu.memory_space<vmem>>, %arg3: memref<3x136x128xf32, #tpu.memory_space<vmem>>, %arg4: memref<3x136x128xf32, #tpu.memory_space<vmem>>, %arg5: memref<1x32x128xf32, #tpu.memory_space<vmem>>, %arg6: memref<1x2x128xf32, #tpu.memory_space<vmem>>) attributes {dimension_semantics = [#tpu.dimension_semantics<parallel>], iteration_bounds = array<i64: 2>, scalar_prefetch = 0 : i64, scratch_operands = 0 : i64, tpu.core_type = #tpu.core_type<tc>, window_params = [{transform_indices = @transform_0, window_bounds = array<i64: 1, 32, 128>}, {transform_indices = @transform_1, window_bounds = array<i64: 1, 32, 128>}, {pipeline_mode = #tpu.pipeline_mode<synchronous>, transform_indices = @transform_2, window_bounds = array<i64: 3, 136, 128>}, {pipeline_mode = #tpu.pipeline_mode<synchronous>, transform_indices = @transform_3, window_bounds = array<i64: 3, 136, 128>}, {transform_indices = @transform_4, window_bounds = array<i64: 1, 32, 128>}, {transform_indices = @transform_5, window_bounds = array<i64: 1, 2, 128>}]} {
    %cst = arith.constant 0.000000e+00 : f32
    %0 = vector.broadcast %cst : f32 to vector<32x128xf32>
    %c0 = arith.constant 0 : index
    %c0_0 = arith.constant 0 : index
    %c0_1 = arith.constant 0 : index
    %1 = vector.load %arg1[%c0, %c0_0, %c0_1] : memref<1x32x128xf32, #tpu.memory_space<vmem>>, vector<1x32x128xf32>
    %2 = vector.shape_cast %1 : vector<1x32x128xf32> to vector<32x128xf32>
    %cst_2 = arith.constant 0.000000e+00 : f32
    %3 = vector.broadcast %cst_2 : f32 to vector<32x4xf32>
    %4 = tpu.concatenate %3, %2, %3 in 1 : vector<32x4xf32>, vector<32x128xf32>, vector<32x4xf32> -> vector<32x136xf32>
    %cst_3 = arith.constant 0.000000e+00 : f32
    %5 = vector.broadcast %cst_3 : f32 to vector<1x136xf32>
    %6 = tpu.concatenate %5, %4, %5 in 0 : vector<1x136xf32>, vector<32x136xf32>, vector<1x136xf32> -> vector<34x136xf32>
    %7 = vector.extract_strided_slice %6 {offsets = [0, 0], sizes = [32, 136], strides = [1, 1]} : vector<34x136xf32> to vector<32x136xf32>
    %c0_4 = arith.constant 0 : index
    %c0_5 = arith.constant 0 : index
    %c0_6 = arith.constant 0 : index
    %8 = vector.load %arg3[%c0_4, %c0_5, %c0_6] : memref<3x136x128xf32, #tpu.memory_space<vmem>>, vector<1x136x128xf32>
    %9 = vector.shape_cast %8 : vector<1x136x128xf32> to vector<136x128xf32>
    %cst_7 = arith.constant dense<0.000000e+00> : vector<32x128xf32>
    %10 = tpu.matmul %7, %9, %cst_7 {dimension_numbers = #tpu.dot_dimension_numbers<[1], [0], [0], [1], [0, 0, 1, 1], [], []>} : vector<32x136xf32>, vector<136x128xf32>, vector<32x128xf32> -> vector<32x128xf32>
    %11 = arith.addf %0, %10 : vector<32x128xf32>
    %12 = vector.extract_strided_slice %6 {offsets = [1, 0], sizes = [32, 136], strides = [1, 1]} : vector<34x136xf32> to vector<32x136xf32>
    %c1 = arith.constant 1 : index
    %c0_8 = arith.constant 0 : index
    %c0_9 = arith.constant 0 : index
    %13 = vector.load %arg3[%c1, %c0_8, %c0_9] : memref<3x136x128xf32, #tpu.memory_space<vmem>>, vector<1x136x128xf32>
    %14 = vector.shape_cast %13 : vector<1x136x128xf32> to vector<136x128xf32>
    %cst_10 = arith.constant dense<0.000000e+00> : vector<32x128xf32>
    %15 = tpu.matmul %12, %14, %cst_10 {dimension_numbers = #tpu.dot_dimension_numbers<[1], [0], [0], [1], [0, 0, 1, 1], [], []>} : vector<32x136xf32>, vector<136x128xf32>, vector<32x128xf32> -> vector<32x128xf32>
    %16 = arith.addf %11, %15 : vector<32x128xf32>
    %17 = vector.extract_strided_slice %6 {offsets = [2, 0], sizes = [32, 136], strides = [1, 1]} : vector<34x136xf32> to vector<32x136xf32>
    %c2 = arith.constant 2 : index
    %c0_11 = arith.constant 0 : index
    %c0_12 = arith.constant 0 : index
    %18 = vector.load %arg3[%c2, %c0_11, %c0_12] : memref<3x136x128xf32, #tpu.memory_space<vmem>>, vector<1x136x128xf32>
    %19 = vector.shape_cast %18 : vector<1x136x128xf32> to vector<136x128xf32>
    %cst_13 = arith.constant dense<0.000000e+00> : vector<32x128xf32>
    %20 = tpu.matmul %17, %19, %cst_13 {dimension_numbers = #tpu.dot_dimension_numbers<[1], [0], [0], [1], [0, 0, 1, 1], [], []>} : vector<32x136xf32>, vector<136x128xf32>, vector<32x128xf32> -> vector<32x128xf32>
    %21 = arith.addf %16, %20 : vector<32x128xf32>
    %c0_14 = arith.constant 0 : index
    %c0_15 = arith.constant 0 : index
    %c0_16 = arith.constant 0 : index
    %22 = vector.load %arg2[%c0_14, %c0_15, %c0_16] : memref<1x32x128xf32, #tpu.memory_space<vmem>>, vector<1x32x128xf32>
    %23 = vector.shape_cast %22 : vector<1x32x128xf32> to vector<32x128xf32>
    %cst_17 = arith.constant 0.000000e+00 : f32
    %24 = vector.broadcast %cst_17 : f32 to vector<32x4xf32>
    %25 = tpu.concatenate %24, %23, %24 in 1 : vector<32x4xf32>, vector<32x128xf32>, vector<32x4xf32> -> vector<32x136xf32>
    %cst_18 = arith.constant 0.000000e+00 : f32
    %26 = vector.broadcast %cst_18 : f32 to vector<1x136xf32>
    %27 = tpu.concatenate %26, %25, %26 in 0 : vector<1x136xf32>, vector<32x136xf32>, vector<1x136xf32> -> vector<34x136xf32>
    %28 = vector.extract_strided_slice %27 {offsets = [0, 0], sizes = [32, 136], strides = [1, 1]} : vector<34x136xf32> to vector<32x136xf32>
    %c0_19 = arith.constant 0 : index
    %c0_20 = arith.constant 0 : index
    %c0_21 = arith.constant 0 : index
    %29 = vector.load %arg4[%c0_19, %c0_20, %c0_21] : memref<3x136x128xf32, #tpu.memory_space<vmem>>, vector<1x136x128xf32>
    %30 = vector.shape_cast %29 : vector<1x136x128xf32> to vector<136x128xf32>
    %cst_22 = arith.constant dense<0.000000e+00> : vector<32x128xf32>
    %31 = tpu.matmul %28, %30, %cst_22 {dimension_numbers = #tpu.dot_dimension_numbers<[1], [0], [0], [1], [0, 0, 1, 1], [], []>} : vector<32x136xf32>, vector<136x128xf32>, vector<32x128xf32> -> vector<32x128xf32>
    %32 = arith.addf %21, %31 : vector<32x128xf32>
    %33 = vector.extract_strided_slice %27 {offsets = [1, 0], sizes = [32, 136], strides = [1, 1]} : vector<34x136xf32> to vector<32x136xf32>
    %c1_23 = arith.constant 1 : index
    %c0_24 = arith.constant 0 : index
    %c0_25 = arith.constant 0 : index
    %34 = vector.load %arg4[%c1_23, %c0_24, %c0_25] : memref<3x136x128xf32, #tpu.memory_space<vmem>>, vector<1x136x128xf32>
    %35 = vector.shape_cast %34 : vector<1x136x128xf32> to vector<136x128xf32>
    %cst_26 = arith.constant dense<0.000000e+00> : vector<32x128xf32>
    %36 = tpu.matmul %33, %35, %cst_26 {dimension_numbers = #tpu.dot_dimension_numbers<[1], [0], [0], [1], [0, 0, 1, 1], [], []>} : vector<32x136xf32>, vector<136x128xf32>, vector<32x128xf32> -> vector<32x128xf32>
    %37 = arith.addf %32, %36 : vector<32x128xf32>
    %38 = vector.extract_strided_slice %27 {offsets = [2, 0], sizes = [32, 136], strides = [1, 1]} : vector<34x136xf32> to vector<32x136xf32>
    %c2_27 = arith.constant 2 : index
    %c0_28 = arith.constant 0 : index
    %c0_29 = arith.constant 0 : index
    %39 = vector.load %arg4[%c2_27, %c0_28, %c0_29] : memref<3x136x128xf32, #tpu.memory_space<vmem>>, vector<1x136x128xf32>
    %40 = vector.shape_cast %39 : vector<1x136x128xf32> to vector<136x128xf32>
    %cst_30 = arith.constant dense<0.000000e+00> : vector<32x128xf32>
    %41 = tpu.matmul %38, %40, %cst_30 {dimension_numbers = #tpu.dot_dimension_numbers<[1], [0], [0], [1], [0, 0, 1, 1], [], []>} : vector<32x136xf32>, vector<136x128xf32>, vector<32x128xf32> -> vector<32x128xf32>
    %42 = arith.addf %37, %41 : vector<32x128xf32>
    %c0_31 = arith.constant 0 : index
    %c0_32 = arith.constant 0 : index
    %c0_33 = arith.constant 0 : index
    %43 = vector.load %arg5[%c0_31, %c0_32, %c0_33] : memref<1x32x128xf32, #tpu.memory_space<vmem>>, vector<1x32x128xf32>
    %44 = vector.shape_cast %43 : vector<1x32x128xf32> to vector<32x128xf32>
    %45 = vector.shape_cast %42 : vector<32x128xf32> to vector<1x32x128xf32>
    tpu.vector_store %arg5[%c0_31, %c0_32, %c0_33], %45 {strides = array<i32>} : memref<1x32x128xf32, #tpu.memory_space<vmem>>, vector<1x32x128xf32>,
    %cst_34 = arith.constant dense<0.000000e+00> : vector<128xf32>
    %46 = vector.multi_reduction <add>, %42, %cst_34 [0] : vector<32x128xf32> to vector<128xf32>
    %47 = vector.shape_cast %46 : vector<128xf32> to vector<1x128xf32>
    %c0_35 = arith.constant 0 : index
    %c0_36 = arith.constant 0 : index
    %c0_37 = arith.constant 0 : index
    %48 = vector.load %arg6[%c0_35, %c0_36, %c0_37] : memref<1x2x128xf32, #tpu.memory_space<vmem>>, vector<1x1x128xf32>
    %49 = vector.shape_cast %48 : vector<1x1x128xf32> to vector<1x128xf32>
    %50 = vector.shape_cast %47 : vector<1x128xf32> to vector<1x1x128xf32>
    tpu.vector_store %arg6[%c0_35, %c0_36, %c0_37], %50 {strides = array<i32>} : memref<1x2x128xf32, #tpu.memory_space<vmem>>, vector<1x1x128xf32>,
    %51 = arith.mulf %42, %42 : vector<32x128xf32>
    %cst_38 = arith.constant dense<0.000000e+00> : vector<128xf32>
    %52 = vector.multi_reduction <add>, %51, %cst_38 [0] : vector<32x128xf32> to vector<128xf32>
    %53 = vector.shape_cast %52 : vector<128xf32> to vector<1x128xf32>
    %c0_39 = arith.constant 0 : index
    %c1_40 = arith.constant 1 : index
    %c0_41 = arith.constant 0 : index
    %54 = vector.load %arg6[%c0_39, %c1_40, %c0_41] : memref<1x2x128xf32, #tpu.memory_space<vmem>>, vector<1x1x128xf32>
    %55 = vector.shape_cast %54 : vector<1x1x128xf32> to vector<1x128xf32>
    %56 = vector.shape_cast %53 : vector<1x128xf32> to vector<1x1x128xf32>
    tpu.vector_store %arg6[%c0_39, %c1_40, %c0_41], %56 {strides = array<i32>} : memref<1x2x128xf32, #tpu.memory_space<vmem>>, vector<1x1x128xf32>,
    return
  }
  func.func @transform_0(%arg0: i32) -> (i32, i32, i32) {
    %c0_i32 = arith.constant 0 : i32
    %c0_i32_0 = arith.constant 0 : i32
    %c0_i32_1 = arith.constant 0 : i32
    return %arg0, %c0_i32, %c0_i32_0 : i32, i32, i32
  }
  func.func @transform_1(%arg0: i32) -> (i32, i32, i32) {
    %c0_i32 = arith.constant 0 : i32
    %c0_i32_0 = arith.constant 0 : i32
    %c0_i32_1 = arith.constant 0 : i32
    return %arg0, %c0_i32, %c0_i32_0 : i32, i32, i32
  }
  func.func @transform_2(%arg0: i32) -> (i32, i32, i32) {
    %c0_i32 = arith.constant 0 : i32
    %c0_i32_0 = arith.constant 0 : i32
    %c0_i32_1 = arith.constant 0 : i32
    %c0_i32_2 = arith.constant 0 : i32
    return %c0_i32, %c0_i32_0, %c0_i32_1 : i32, i32, i32
  }
  func.func @transform_3(%arg0: i32) -> (i32, i32, i32) {
    %c0_i32 = arith.constant 0 : i32
    %c0_i32_0 = arith.constant 0 : i32
    %c0_i32_1 = arith.constant 0 : i32
    %c0_i32_2 = arith.constant 0 : i32
    return %c0_i32, %c0_i32_0, %c0_i32_1 : i32, i32, i32
  }
  func.func @transform_4(%arg0: i32) -> (i32, i32, i32) {
    %c0_i32 = arith.constant 0 : i32
    %c0_i32_0 = arith.constant 0 : i32
    %c0_i32_1 = arith.constant 0 : i32
    return %arg0, %c0_i32, %c0_i32_0 : i32, i32, i32
  }
  func.func @transform_5(%arg0: i32) -> (i32, i32, i32) {
    %c0_i32 = arith.constant 0 : i32
    %c0_i32_0 = arith.constant 0 : i32
    %c0_i32_1 = arith.constant 0 : i32
    return %arg0, %c0_i32, %c0_i32_0 : i32, i32, i32
  }
}

module attributes {stable_mosaic.version = 11 : i64} {
  func.func @kernel(%arg0: i32, %arg1: memref<1x32x128xf32, #tpu.memory_space<vmem>>, %arg2: memref<3x136x128xf32, #tpu.memory_space<vmem>>, %arg3: memref<2x128xf32, #tpu.memory_space<vmem>>, %arg4: memref<1x32x128xf32, #tpu.memory_space<vmem>>, %arg5: memref<1x2x128xf32, #tpu.memory_space<vmem>>) attributes {dimension_semantics = [#tpu.dimension_semantics<parallel>], iteration_bounds = array<i64: 2>, scalar_prefetch = 0 : i64, scratch_operands = 0 : i64, tpu.core_type = #tpu.core_type<tc>, window_params = [{transform_indices = @transform_0, window_bounds = array<i64: 1, 32, 128>}, {pipeline_mode = #tpu.pipeline_mode<synchronous>, transform_indices = @transform_1, window_bounds = array<i64: 3, 136, 128>}, {pipeline_mode = #tpu.pipeline_mode<synchronous>, transform_indices = @transform_2, window_bounds = array<i64: 2, 128>}, {transform_indices = @transform_3, window_bounds = array<i64: 1, 32, 128>}, {transform_indices = @transform_4, window_bounds = array<i64: 1, 2, 128>}]} {
    %cst = arith.constant 0.000000e+00 : f32
    %0 = vector.broadcast %cst : f32 to vector<32x128xf32>
    %c0 = arith.constant 0 : index
    %c0_0 = arith.constant 0 : index
    %c0_1 = arith.constant 0 : index
    %1 = vector.load %arg1[%c0, %c0_0, %c0_1] : memref<1x32x128xf32, #tpu.memory_space<vmem>>, vector<1x32x128xf32>
    %2 = vector.shape_cast %1 : vector<1x32x128xf32> to vector<32x128xf32>
    %c0_2 = arith.constant 0 : index
    %c0_3 = arith.constant 0 : index
    %3 = vector.load %arg3[%c0_2, %c0_3] : memref<2x128xf32, #tpu.memory_space<vmem>>, vector<1x128xf32>
    %4 = vector.broadcast %3 : vector<1x128xf32> to vector<32x128xf32>
    %5 = arith.mulf %2, %4 : vector<32x128xf32>
    %c1 = arith.constant 1 : index
    %c0_4 = arith.constant 0 : index
    %6 = vector.load %arg3[%c1, %c0_4] : memref<2x128xf32, #tpu.memory_space<vmem>>, vector<1x128xf32>
    %7 = vector.broadcast %6 : vector<1x128xf32> to vector<32x128xf32>
    %8 = arith.addf %5, %7 : vector<32x128xf32>
    %cst_5 = arith.constant 0.000000e+00 : f32
    %9 = vector.broadcast %cst_5 : f32 to vector<32x128xf32>
    %10 = arith.maximumf %8, %9 : vector<32x128xf32>
    %cst_6 = arith.constant 0.000000e+00 : f32
    %11 = vector.broadcast %cst_6 : f32 to vector<32x4xf32>
    %12 = tpu.concatenate %11, %10, %11 in 1 : vector<32x4xf32>, vector<32x128xf32>, vector<32x4xf32> -> vector<32x136xf32>
    %cst_7 = arith.constant 0.000000e+00 : f32
    %13 = vector.broadcast %cst_7 : f32 to vector<1x136xf32>
    %14 = tpu.concatenate %13, %12, %13 in 0 : vector<1x136xf32>, vector<32x136xf32>, vector<1x136xf32> -> vector<34x136xf32>
    %15 = vector.extract_strided_slice %14 {offsets = [0, 0], sizes = [32, 136], strides = [1, 1]} : vector<34x136xf32> to vector<32x136xf32>
    %c0_8 = arith.constant 0 : index
    %c0_9 = arith.constant 0 : index
    %c0_10 = arith.constant 0 : index
    %16 = vector.load %arg2[%c0_8, %c0_9, %c0_10] : memref<3x136x128xf32, #tpu.memory_space<vmem>>, vector<1x136x128xf32>
    %17 = vector.shape_cast %16 : vector<1x136x128xf32> to vector<136x128xf32>
    %cst_11 = arith.constant dense<0.000000e+00> : vector<32x128xf32>
    %18 = tpu.matmul %15, %17, %cst_11 {dimension_numbers = #tpu.dot_dimension_numbers<[1], [0], [0], [1], [0, 0, 1, 1], [], []>} : vector<32x136xf32>, vector<136x128xf32>, vector<32x128xf32> -> vector<32x128xf32>
    %19 = arith.addf %0, %18 : vector<32x128xf32>
    %20 = vector.extract_strided_slice %14 {offsets = [1, 0], sizes = [32, 136], strides = [1, 1]} : vector<34x136xf32> to vector<32x136xf32>
    %c1_12 = arith.constant 1 : index
    %c0_13 = arith.constant 0 : index
    %c0_14 = arith.constant 0 : index
    %21 = vector.load %arg2[%c1_12, %c0_13, %c0_14] : memref<3x136x128xf32, #tpu.memory_space<vmem>>, vector<1x136x128xf32>
    %22 = vector.shape_cast %21 : vector<1x136x128xf32> to vector<136x128xf32>
    %cst_15 = arith.constant dense<0.000000e+00> : vector<32x128xf32>
    %23 = tpu.matmul %20, %22, %cst_15 {dimension_numbers = #tpu.dot_dimension_numbers<[1], [0], [0], [1], [0, 0, 1, 1], [], []>} : vector<32x136xf32>, vector<136x128xf32>, vector<32x128xf32> -> vector<32x128xf32>
    %24 = arith.addf %19, %23 : vector<32x128xf32>
    %25 = vector.extract_strided_slice %14 {offsets = [2, 0], sizes = [32, 136], strides = [1, 1]} : vector<34x136xf32> to vector<32x136xf32>
    %c2 = arith.constant 2 : index
    %c0_16 = arith.constant 0 : index
    %c0_17 = arith.constant 0 : index
    %26 = vector.load %arg2[%c2, %c0_16, %c0_17] : memref<3x136x128xf32, #tpu.memory_space<vmem>>, vector<1x136x128xf32>
    %27 = vector.shape_cast %26 : vector<1x136x128xf32> to vector<136x128xf32>
    %cst_18 = arith.constant dense<0.000000e+00> : vector<32x128xf32>
    %28 = tpu.matmul %25, %27, %cst_18 {dimension_numbers = #tpu.dot_dimension_numbers<[1], [0], [0], [1], [0, 0, 1, 1], [], []>} : vector<32x136xf32>, vector<136x128xf32>, vector<32x128xf32> -> vector<32x128xf32>
    %29 = arith.addf %24, %28 : vector<32x128xf32>
    %c0_19 = arith.constant 0 : index
    %c0_20 = arith.constant 0 : index
    %c0_21 = arith.constant 0 : index
    %30 = vector.load %arg4[%c0_19, %c0_20, %c0_21] : memref<1x32x128xf32, #tpu.memory_space<vmem>>, vector<1x32x128xf32>
    %31 = vector.shape_cast %30 : vector<1x32x128xf32> to vector<32x128xf32>
    %32 = vector.shape_cast %29 : vector<32x128xf32> to vector<1x32x128xf32>
    tpu.vector_store %arg4[%c0_19, %c0_20, %c0_21], %32 {strides = array<i32>} : memref<1x32x128xf32, #tpu.memory_space<vmem>>, vector<1x32x128xf32>,
    %cst_22 = arith.constant dense<0.000000e+00> : vector<128xf32>
    %33 = vector.multi_reduction <add>, %29, %cst_22 [0] : vector<32x128xf32> to vector<128xf32>
    %34 = vector.shape_cast %33 : vector<128xf32> to vector<1x128xf32>
    %c0_23 = arith.constant 0 : index
    %c0_24 = arith.constant 0 : index
    %c0_25 = arith.constant 0 : index
    %35 = vector.load %arg5[%c0_23, %c0_24, %c0_25] : memref<1x2x128xf32, #tpu.memory_space<vmem>>, vector<1x1x128xf32>
    %36 = vector.shape_cast %35 : vector<1x1x128xf32> to vector<1x128xf32>
    %37 = vector.shape_cast %34 : vector<1x128xf32> to vector<1x1x128xf32>
    tpu.vector_store %arg5[%c0_23, %c0_24, %c0_25], %37 {strides = array<i32>} : memref<1x2x128xf32, #tpu.memory_space<vmem>>, vector<1x1x128xf32>,
    %38 = arith.mulf %29, %29 : vector<32x128xf32>
    %cst_26 = arith.constant dense<0.000000e+00> : vector<128xf32>
    %39 = vector.multi_reduction <add>, %38, %cst_26 [0] : vector<32x128xf32> to vector<128xf32>
    %40 = vector.shape_cast %39 : vector<128xf32> to vector<1x128xf32>
    %c0_27 = arith.constant 0 : index
    %c1_28 = arith.constant 1 : index
    %c0_29 = arith.constant 0 : index
    %41 = vector.load %arg5[%c0_27, %c1_28, %c0_29] : memref<1x2x128xf32, #tpu.memory_space<vmem>>, vector<1x1x128xf32>
    %42 = vector.shape_cast %41 : vector<1x1x128xf32> to vector<1x128xf32>
    %43 = vector.shape_cast %40 : vector<1x128xf32> to vector<1x1x128xf32>
    tpu.vector_store %arg5[%c0_27, %c1_28, %c0_29], %43 {strides = array<i32>} : memref<1x2x128xf32, #tpu.memory_space<vmem>>, vector<1x1x128xf32>,
    return
  }
  func.func @transform_0(%arg0: i32) -> (i32, i32, i32) {
    %c0_i32 = arith.constant 0 : i32
    %c0_i32_0 = arith.constant 0 : i32
    %c0_i32_1 = arith.constant 0 : i32
    return %arg0, %c0_i32, %c0_i32_0 : i32, i32, i32
  }
  func.func @transform_1(%arg0: i32) -> (i32, i32, i32) {
    %c0_i32 = arith.constant 0 : i32
    %c0_i32_0 = arith.constant 0 : i32
    %c0_i32_1 = arith.constant 0 : i32
    %c0_i32_2 = arith.constant 0 : i32
    return %c0_i32, %c0_i32_0, %c0_i32_1 : i32, i32, i32
  }
  func.func @transform_2(%arg0: i32) -> (i32, i32) {
    %c0_i32 = arith.constant 0 : i32
    %c0_i32_0 = arith.constant 0 : i32
    %c0_i32_1 = arith.constant 0 : i32
    return %c0_i32, %c0_i32_0 : i32, i32
  }
  func.func @transform_3(%arg0: i32) -> (i32, i32, i32) {
    %c0_i32 = arith.constant 0 : i32
    %c0_i32_0 = arith.constant 0 : i32
    %c0_i32_1 = arith.constant 0 : i32
    return %arg0, %c0_i32, %c0_i32_0 : i32, i32, i32
  }
  func.func @transform_4(%arg0: i32) -> (i32, i32, i32) {
    %c0_i32 = arith.constant 0 : i32
    %c0_i32_0 = arith.constant 0 : i32
    %c0_i32_1 = arith.constant 0 : i32
    return %arg0, %c0_i32, %c0_i32_0 : i32, i32, i32
  }
}

module attributes {stable_mosaic.version = 11 : i64} {
  func.func @bn_relu_kernel(%arg0: i32, %arg1: memref<1x32x128xf32, #tpu.memory_space<vmem>>, %arg2: memref<2x128xf32, #tpu.memory_space<vmem>>, %arg3: memref<1x32x128xf32, #tpu.memory_space<vmem>>) attributes {dimension_semantics = [#tpu.dimension_semantics<parallel>], iteration_bounds = array<i64: 2>, scalar_prefetch = 0 : i64, scratch_operands = 0 : i64, tpu.core_type = #tpu.core_type<tc>, window_params = [{transform_indices = @transform_0, window_bounds = array<i64: 1, 32, 128>}, {pipeline_mode = #tpu.pipeline_mode<synchronous>, transform_indices = @transform_1, window_bounds = array<i64: 2, 128>}, {transform_indices = @transform_2, window_bounds = array<i64: 1, 32, 128>}]} {
    %c0 = arith.constant 0 : index
    %c0_0 = arith.constant 0 : index
    %c0_1 = arith.constant 0 : index
    %0 = vector.load %arg1[%c0, %c0_0, %c0_1] : memref<1x32x128xf32, #tpu.memory_space<vmem>>, vector<1x32x128xf32>
    %1 = vector.shape_cast %0 : vector<1x32x128xf32> to vector<32x128xf32>
    %c0_2 = arith.constant 0 : index
    %c0_3 = arith.constant 0 : index
    %2 = vector.load %arg2[%c0_2, %c0_3] : memref<2x128xf32, #tpu.memory_space<vmem>>, vector<1x128xf32>
    %3 = vector.broadcast %2 : vector<1x128xf32> to vector<32x128xf32>
    %4 = arith.mulf %1, %3 : vector<32x128xf32>
    %c1 = arith.constant 1 : index
    %c0_4 = arith.constant 0 : index
    %5 = vector.load %arg2[%c1, %c0_4] : memref<2x128xf32, #tpu.memory_space<vmem>>, vector<1x128xf32>
    %6 = vector.broadcast %5 : vector<1x128xf32> to vector<32x128xf32>
    %7 = arith.addf %4, %6 : vector<32x128xf32>
    %cst = arith.constant 0.000000e+00 : f32
    %8 = vector.broadcast %cst : f32 to vector<32x128xf32>
    %9 = arith.maximumf %7, %8 : vector<32x128xf32>
    %c0_5 = arith.constant 0 : index
    %c0_6 = arith.constant 0 : index
    %c0_7 = arith.constant 0 : index
    %10 = vector.load %arg3[%c0_5, %c0_6, %c0_7] : memref<1x32x128xf32, #tpu.memory_space<vmem>>, vector<1x32x128xf32>
    %11 = vector.shape_cast %10 : vector<1x32x128xf32> to vector<32x128xf32>
    %12 = vector.shape_cast %9 : vector<32x128xf32> to vector<1x32x128xf32>
    tpu.vector_store %arg3[%c0_5, %c0_6, %c0_7], %12 {strides = array<i32>} : memref<1x32x128xf32, #tpu.memory_space<vmem>>, vector<1x32x128xf32>,
    return
  }
  func.func @transform_0(%arg0: i32) -> (i32, i32, i32) {
    %c0_i32 = arith.constant 0 : i32
    %c0_i32_0 = arith.constant 0 : i32
    %c0_i32_1 = arith.constant 0 : i32
    return %arg0, %c0_i32, %c0_i32_0 : i32, i32, i32
  }
  func.func @transform_1(%arg0: i32) -> (i32, i32) {
    %c0_i32 = arith.constant 0 : i32
    %c0_i32_0 = arith.constant 0 : i32
    %c0_i32_1 = arith.constant 0 : i32
    return %c0_i32, %c0_i32_0 : i32, i32
  }
  func.func @transform_2(%arg0: i32) -> (i32, i32, i32) {
    %c0_i32 = arith.constant 0 : i32
    %c0_i32_0 = arith.constant 0 : i32
    %c0_i32_1 = arith.constant 0 : i32
    return %arg0, %c0_i32, %c0_i32_0 : i32, i32, i32
  }
}

</mosaic_0001>

<llo_original>
// kernel: tile.27
$region0: #{tile.27}
  #allocation0 [shape = 's32[1]{0}', space=sflag, size = 0x4, scoped, tag = 'scoped memory for tile.27']
  %s0 = inlined_call_operand.vmem [shape: f32[4], index: 0, kind: input, shape index: {}]
  %s1 = inlined_call_operand.vmem [shape: f32[32,4], index: 1, kind: output, shape index: {}]
  // Predicated region
  $region2: #{tile.27} parent=0 // pred_check
    _
  $region3: #{tile.27} parent=0 // pred_check_branch
    %3 = sbr.rel (0) target = $region5
  $region4: #{tile.27} parent=0 // pred_region
    _
  $region5: #{tile.27} parent=0 // pred_fallthru
    _
  %v4 = vld [vmem:[%s0] ss:$0 sm:$0xff]
  %5 = vst [vmem:[%s1] sm:$0xff] %v4
  %s6 = scalar_lea.vmem %s1, 8
  %7 = vst [vmem:[%s6] sm:$0xff] %v4
  %s8 = scalar_lea.vmem %s1, 16
  %9 = vst [vmem:[%s8] sm:$0xff] %v4
  %s10 = scalar_lea.vmem %s1, 24
  %11 = vst [vmem:[%s10] sm:$0xff] %v4

// kernel: tile.29
$region0: #{tile.29}
  %s0 = inlined_call_operand.vmem [shape: f32[32,4], index: 0, kind: input, shape index: {}]
  %s1 = inlined_call_operand.vmem [shape: f32[1,128], index: 1, kind: output, shape index: {}]
  $region1: #{tile.29} parent=0
    #allocation0 [shape = 'u8[4096]{0}', space=vmem, size = 0x1000, scoped, tag = 'scoped mem for output reshape']
    %v2 = vld [vmem:[%s0] sm:$0x1]
    %vm3 = vcmask 31744
    %4 = vst.msk [vmem:[#allocation0] sm:$0x1] %vm3, %v2
    %s5 = scalar_lea.vmem %s0, 31
    %v6 = vld [vmem:[%s5] sm:$0x1]
    %7 = vrot.lane.b32.xlu0 %v6, 124
    %v8 = vpop.permute.xlu0 %7
    %vm9 = vcmask 1048544
    %10 = vst.msk [vmem:[#allocation0] sm:$0x1] %vm9, %v8
    %s11 = scalar_lea.vmem %s0, 30
    %v12 = vld [vmem:[%s11] sm:$0x1]
    %13 = vrot.lane.b32.xlu0 %v12, 120
    %v14 = vpop.permute.xlu0 %13
    %vm15 = vcmask 1015744
    %16 = vst.msk [vmem:[#allocation0] sm:$0x1] %vm15, %v14
    %s17 = scalar_lea.vmem %s0, 29
    %v18 = vld [vmem:[%s17] sm:$0x1]
    %19 = vrot.lane.b32.xlu0 %v18, 116
    %v20 = vpop.permute.xlu0 %19
    %vm21 = vcmask 982944
    %22 = vst.msk [vmem:[#allocation0] sm:$0x1] %vm21, %v20
    %s23 = scalar_lea.vmem %s0, 28
    %v24 = vld [vmem:[%s23] sm:$0x1]
    %25 = vrot.lane.b32.xlu0 %v24, 112
    %v26 = vpop.permute.xlu0 %25
    %vm27 = vcmask 950144
    %28 = vst.msk [vmem:[#allocation0] sm:$0x1] %vm27, %v26
    %s29 = scalar_lea.vmem %s0, 27
    %v30 = vld [vmem:[%s29] sm:$0x1]
    %31 = vrot.lane.b32.xlu0 %v30, 108
    %v32 = vpop.permute.xlu0 %31
    %vm33 = vcmask 917344
    %34 = vst.msk [vmem:[#allocation0] sm:$0x1] %vm33, %v32
    %s35 = scalar_lea.vmem %s0, 26
    %v36 = vld [vmem:[%s35] sm:$0x1]
    %37 = vrot.lane.b32.xlu0 %v36, 104
    %v38 = vpop.permute.xlu0 %37
    %vm39 = vcmask 884544
    %40 = vst.msk [vmem:[#allocation0] sm:$0x1] %vm39, %v38
    %s41 = scalar_lea.vmem %s0, 25
    %v42 = vld [vmem:[%s41] sm:$0x1]
    %43 = vrot.lane.b32.xlu0 %v42, 100
    %v44 = vpop.permute.xlu0 %43
    %vm45 = vcmask 851744
    %46 = vst.msk [vmem:[#allocation0] sm:$0x1] %vm45, %v44
    %s47 = scalar_lea.vmem %s0, 24
    %v48 = vld [vmem:[%s47] sm:$0x1]
    %49 = vrot.lane.b32.xlu0 %v48, 96
    %v50 = vpop.permute.xlu0 %49
    %vm51 = vcmask 818944
    %52 = vst.msk [vmem:[#allocation0] sm:$0x1] %vm51, %v50
    %s53 = scalar_lea.vmem %s0, 23
    %v54 = vld [vmem:[%s53] sm:$0x1]
    %55 = vrot.lane.b32.xlu0 %v54, 92
    %v56 = vpop.permute.xlu0 %55
    %vm57 = vcmask 786144
    %58 = vst.msk [vmem:[#allocation0] sm:$0x1] %vm57, %v56
    %s59 = scalar_lea.vmem %s0, 22
    %v60 = vld [vmem:[%s59] sm:$0x1]
    %61 = vrot.lane.b32.xlu0 %v60, 88
    %v62 = vpop.permute.xlu0 %61
    %vm63 = vcmask 753344
    %64 = vst.msk [vmem:[#allocation0] sm:$0x1] %vm63, %v62
    %s65 = scalar_lea.vmem %s0, 21
    %v66 = vld [vmem:[%s65] sm:$0x1]
    %67 = vrot.lane.b32.xlu0 %v66, 84
    %v68 = vpop.permute.xlu0 %67
    %vm69 = vcmask 720544
    %70 = vst.msk [vmem:[#allocation0] sm:$0x1] %vm69, %v68
    %s71 = scalar_lea.vmem %s0, 20
    %v72 = vld [vmem:[%s71] sm:$0x1]
    %73 = vrot.lane.b32.xlu0 %v72, 80
    %v74 = vpop.permute.xlu0 %73
    %vm75 = vcmask 687744
    %76 = vst.msk [vmem:[#allocation0] sm:$0x1] %vm75, %v74
    %s77 = scalar_lea.vmem %s0, 19
    %v78 = vld [vmem:[%s77] sm:$0x1]
    %79 = vrot.lane.b32.xlu0 %v78, 76
    %v80 = vpop.permute.xlu0 %79
    %vm81 = vcmask 654944
    %82 = vst.msk [vmem:[#allocation0] sm:$0x1] %vm81, %v80
    %s83 = scalar_lea.vmem %s0, 18
    %v84 = vld [vmem:[%s83] sm:$0x1]
    %85 = vrot.lane.b32.xlu0 %v84, 72
    %v86 = vpop.permute.xlu0 %85
    %vm87 = vcmask 622144
    %88 = vst.msk [vmem:[#allocation0] sm:$0x1] %vm87, %v86
    %s89 = scalar_lea.vmem %s0, 17
    %v90 = vld [vmem:[%s89] sm:$0x1]
    %91 = vrot.lane.b32.xlu0 %v90, 68
    %v92 = vpop.permute.xlu0 %91
    %vm93 = vcmask 589344
    %94 = vst.msk [vmem:[#allocation0] sm:$0x1] %vm93, %v92
    %s95 = scalar_lea.vmem %s0, 16
    %v96 = vld [vmem:[%s95] sm:$0x1]
    %97 = vrot.lane.b32.xlu0 %v96, 64
    %v98 = vpop.permute.xlu0 %97
    %vm99 = vcmask 556544
    %100 = vst.msk [vmem:[#allocation0] sm:$0x1] %vm99, %v98
    %s101 = scalar_lea.vmem %s0, 15
    %v102 = vld [vmem:[%s101] sm:$0x1]
    %103 = vrot.lane.b32.xlu0 %v102, 60
    %v104 = vpop.permute.xlu0 %103
    %vm105 = vcmask 523744
    %106 = vst.msk [vmem:[#allocation0] sm:$0x1] %vm105, %v104
    %s107 = scalar_lea.vmem %s0, 14
    %v108 = vld [vmem:[%s107] sm:$0x1]
    %109 = vrot.lane.b32.xlu0 %v108, 56
    %v110 = vpop.permute.xlu0 %109
    %vm111 = vcmask 490944
    %112 = vst.msk [vmem:[#allocation0] sm:$0x1] %vm111, %v110
    %s113 = scalar_lea.vmem %s0, 13
    %v114 = vld [vmem:[%s113] sm:$0x1]
    %115 = vrot.lane.b32.xlu0 %v114, 52
    %v116 = vpop.permute.xlu0 %115
    %vm117 = vcmask 458144
    %118 = vst.msk [vmem:[#allocation0] sm:$0x1] %vm117, %v116
    %s119 = scalar_lea.vmem %s0, 12
    %v120 = vld [vmem:[%s119] sm:$0x1]
    %121 = vrot.lane.b32.xlu0 %v120, 48
    %v122 = vpop.permute.xlu0 %121
    %vm123 = vcmask 425344
    %124 = vst.msk [vmem:[#allocation0] sm:$0x1] %vm123, %v122
    %s125 = scalar_lea.vmem %s0, 11
    %v126 = vld [vmem:[%s125] sm:$0x1]
    %127 = vrot.lane.b32.xlu0 %v126, 44
    %v128 = vpop.permute.xlu0 %127
    %vm129 = vcmask 392544
    %130 = vst.msk [vmem:[#allocation0] sm:$0x1] %vm129, %v128
    %s131 = scalar_lea.vmem %s0, 10
    %v132 = vld [vmem:[%s131] sm:$0x1]
    %133 = vrot.lane.b32.xlu0 %v132, 40
    %v134 = vpop.permute.xlu0 %133
    %vm135 = vcmask 359744
    %136 = vst.msk [vmem:[#allocation0] sm:$0x1] %vm135, %v134
    %s137 = scalar_lea.vmem %s0, 9
    %v138 = vld [vmem:[%s137] sm:$0x1]
    %139 = vrot.lane.b32.xlu0 %v138, 36
    %v140 = vpop.permute.xlu0 %139
    %vm141 = vcmask 326944
    %142 = vst.msk [vmem:[#allocation0] sm:$0x1] %vm141, %v140
    %s143 = scalar_lea.vmem %s0, 8
    %v144 = vld [vmem:[%s143] sm:$0x1]
    %145 = vrot.lane.b32.xlu0 %v144, 32
    %v146 = vpop.permute.xlu0 %145
    %vm147 = vcmask 294144
    %148 = vst.msk [vmem:[#allocation0] sm:$0x1] %vm147, %v146
    %s149 = scalar_lea.vmem %s0, 7
    %v150 = vld [vmem:[%s149] sm:$0x1]
    %151 = vrot.lane.b32.xlu0 %v150, 28
    %v152 = vpop.permute.xlu0 %151
    %vm153 = vcmask 261344
    %154 = vst.msk [vmem:[#allocation0] sm:$0x1] %vm153, %v152
    %s155 = scalar_lea.vmem %s0, 6
    %v156 = vld [vmem:[%s155] sm:$0x1]
    %157 = vrot.lane.b32.xlu0 %v156, 24
    %v158 = vpop.permute.xlu0 %157
    %vm159 = vcmask 228544
    %160 = vst.msk [vmem:[#allocation0] sm:$0x1] %vm159, %v158
    %s161 = scalar_lea.vmem %s0, 5
    %v162 = vld [vmem:[%s161] sm:$0x1]
    %163 = vrot.lane.b32.xlu0 %v162, 20
    %v164 = vpop.permute.xlu0 %163
    %vm165 = vcmask 195744
    %166 = vst.msk [vmem:[#allocation0] sm:$0x1] %vm165, %v164
    %s167 = scalar_lea.vmem %s0, 4
    %v168 = vld [vmem:[%s167] sm:$0x1]
    %169 = vrot.lane.b32.xlu0 %v168, 16
    %v170 = vpop.permute.xlu0 %169
    %vm171 = vcmask 162944
    %172 = vst.msk [vmem:[#allocation0] sm:$0x1] %vm171, %v170
    %s173 = scalar_lea.vmem %s0, 3
    %v174 = vld [vmem:[%s173] sm:$0x1]
    %175 = vrot.lane.b32.xlu0 %v174, 12
    %v176 = vpop.permute.xlu0 %175
    %vm177 = vcmask 130144
    %178 = vst.msk [vmem:[#allocation0] sm:$0x1] %vm177, %v176
    %s179 = scalar_lea.vmem %s0, 2
    %v180 = vld [vmem:[%s179] sm:$0x1]
    %181 = vrot.lane.b32.xlu0 %v180, 8
    %v182 = vpop.permute.xlu0 %181
    %vm183 = vcmask 97344
    %184 = vst.msk [vmem:[#allocation0] sm:$0x1] %vm183, %v182
    %s185 = scalar_lea.vmem %s0, 1
    %v186 = vld [vmem:[%s185] sm:$0x1]
    %187 = vrot.lane.b32.xlu0 %v186, 4
    %v188 = vpop.permute.xlu0 %187
    %vm189 = vcmask 64544
    %190 = vst.msk [vmem:[#allocation0] sm:$0x1] %vm189, %v188
    %s192 = sshll.u32 1, 1
    %s193 = ssub.s32 %s192, 1
    %v195 = vld [vmem:[#allocation0] sm:%s193]
    %s196 = sshll.u32 1, 1
    %s197 = ssub.s32 %s196, 1
    %198 = vst [vmem:[%s1] sm:%s197] %v195

// kernel: up_forward.5
$region0: #{up_forward.5}
  #allocation0 [shape = 'u32[]', space=smem, size = 0x4, offset = 0x4, fixed_abs, tag = 'smem constant byte address 0x4 - core index']
  #allocation1 [shape = 'u32[144,128]{1,0:T(1,128)}', space=vmem, size = 0x12000, scoped, tag = 'internal scratch']
  %s0 = inlined_call_operand.vmem [shape: f32[2,32,128], index: 0, kind: input, shape index: {}]
  %s1 = inlined_call_operand.vmem [shape: f32[2,128], index: 1, kind: input, shape index: {}]
  %s2 = inlined_call_operand.vmem [shape: f32[2,32,128], index: 2, kind: output, shape index: {}]
  %s3 = sld [smem:[#allocation0]]
  $region41: #{up_forward.5} parent=0
    _
  %s5 = ssub.s32 1, %s3
  %s6 = scalar_select 0, %s5, %s3
  loop: start=0, step=1, limit=4
  $region2: #{up_forward.5} parent=0 // loop_pre_header
    _
  $region3: #{up_forward.5} parent=0 // loop_header
    %s8 = sphi 0, %s12
    %p9 = scmp.ge.s32.totalorder %s8, 4
    %s18 = sphi 0, %s20
    %s21 = sphi 0, %s18
    %s22 = sphi 0, %s21
    %s38 = sphi 0, %s22
    %s42 = sphi 0, %s42
    %s44 = sphi 0, %s42
    %s45 = sphi 0, %s44
    %s59 = sphi 0, %s45
    %s65 = sphi 0, %s67
    %s68 = sphi 0, %s65
    %s69 = sphi 0, %s68
    %s85 = sphi 0, %s69
  $region4: #{up_forward.5} parent=0 // loop_header_branch
    %11 = sbr.rel (%p9) target = $region8
  $region5: #{up_forward.5} parent=0 // loop_body
    %s13 = ssub.s32 %s8, 1
    %s14 = ssub.s32 %s8, 2
    %s15 = sadd.s32 %s8, 1
    %s16 = ssub.s32 %s8, %s15
    %p17 = scmp.eq.s32.totalorder %s16, 0
    %s19 = sadd.s32 %s18, 1
    %s20 = scalar_select %p17, %s18, %s19
    %p23 = pneg %p17
    %p24 = scmp.eq.s32.totalorder %s8, 1
    %p25 = por %p23, %p24
    %p26 = scmp.ne.s32.totalorder %s18, %s21
    %p27 = scmp.eq.s32.totalorder %s8, 0
    %p28 = por %p26, %p27
    %p29 = scmp.ne.s32.totalorder %s18, %s21
    %p30 = scmp.eq.s32.totalorder %s13, 1
    %p31 = por %p29, %p30
    %p32 = scmp.ne.s32.totalorder %s21, %s22
    %p33 = scmp.eq.s32.totalorder %s13, 0
    %p34 = por %p32, %p33
    %p35 = scmp.ne.s32.totalorder %s21, %s22
    %p36 = scmp.eq.s32.totalorder %s14, 1
    %p37 = por %p35, %p36
    %p39 = scmp.ne.s32.totalorder %s22, %s38
    %p40 = scmp.eq.s32.totalorder %s14, 0
    %p41 = por %p39, %p40
    %s43 = sadd.s32 %s42, 1
    %p46 = scmp.eq.s32.totalorder %s8, 1
    %p47 = scmp.ne.s32.totalorder %s42, %s44
    %p48 = scmp.eq.s32.totalorder %s8, 0
    %p49 = por %p47, %p48
    %p50 = scmp.ne.s32.totalorder %s42, %s44
    %p51 = scmp.eq.s32.totalorder %s13, 1
    %p52 = por %p50, %p51
    %p53 = scmp.ne.s32.totalorder %s44, %s45
    %p54 = scmp.eq.s32.totalorder %s13, 0
    %p55 = por %p53, %p54
    %p56 = scmp.ne.s32.totalorder %s44, %s45
    %p57 = scmp.eq.s32.totalorder %s14, 1
    %p58 = por %p56, %p57
    %p60 = scmp.ne.s32.totalorder %s45, %s59
    %p61 = scmp.eq.s32.totalorder %s14, 0
    %p62 = por %p60, %p61
    %s63 = ssub.s32 %s8, %s15
    %p64 = scmp.eq.s32.totalorder %s63, 0
    %s66 = sadd.s32 %s65, 1
    %s67 = scalar_select %p64, %s65, %s66
    %p70 = pneg %p64
    %p71 = scmp.eq.s32.totalorder %s8, 1
    %p72 = por %p70, %p71
    %p73 = scmp.ne.s32.totalorder %s65, %s68
    %p74 = scmp.eq.s32.totalorder %s8, 0
    %p75 = por %p73, %p74
    %p76 = scmp.ne.s32.totalorder %s65, %s68
    %p77 = scmp.eq.s32.totalorder %s13, 1
    %p78 = por %p76, %p77
    %p79 = scmp.ne.s32.totalorder %s68, %s69
    %p80 = scmp.eq.s32.totalorder %s13, 0
    %p81 = por %p79, %p80
    %p82 = scmp.ne.s32.totalorder %s68, %s69
    %p83 = scmp.eq.s32.totalorder %s14, 1
    %p84 = por %p82, %p83
    %p86 = scmp.ne.s32.totalorder %s69, %s85
    %p87 = scmp.eq.s32.totalorder %s14, 0
    %p88 = por %p86, %p87
    %p89 = scmp.le.s32.totalorder 1, %s8
    %p90 = scmp.lt.s32.totalorder %s8, 3
    %p91 = pnand %p89, %p90
    %p92 = pneg %p91
    // Predicated region
    $region9: #{up_forward.5} parent=5 // pred_check
      _
    $region10: #{up_forward.5} parent=5 // pred_check_branch
      %94 = sbr.rel (%p91) target = $region12
    $region11: #{up_forward.5} parent=5 // pred_region
      %s95 = ssub.s32 %s8, 1
      // Predicated region
      $region13: #{up_forward.5} parent=11 // pred_check
        %p96 = pneg %p55
      $region14: #{up_forward.5} parent=11 // pred_check_branch
        %98 = sbr.rel (%p96) target = $region16
      $region15: #{up_forward.5} parent=11 // pred_region
        _
      $region16: #{up_forward.5} parent=11 // pred_fallthru
        _
    $region12: #{up_forward.5} parent=5 // pred_fallthru
      _
    %p99 = scmp.lt.s32.totalorder %s8, 2
    // Predicated region
    $region17: #{up_forward.5} parent=5 // pred_check
      %p100 = pneg %p99
    $region18: #{up_forward.5} parent=5 // pred_check_branch
      %102 = sbr.rel (%p100) target = $region20
    $region19: #{up_forward.5} parent=5 // pred_region
      // Predicated region
      $region21: #{up_forward.5} parent=19 // pred_check
        %p103 = pneg %p28
      $region22: #{up_forward.5} parent=19 // pred_check_branch
        %105 = sbr.rel (%p103) target = $region24
      $region23: #{up_forward.5} parent=19 // pred_region
        %p106 = scmp.lt.s32.totalorder %s8, 1
        %s107 = scalar_select %p106, %s8, 1
        %s108 = smul.addr %s107, 4
        %s109 = smul.addr %s108, 8
        %s110 = scalar_lea.vmem %s0, %s109
      $region24: #{up_forward.5} parent=19 // pred_fallthru
        _
    $region20: #{up_forward.5} parent=5 // pred_fallthru
      _
    %p111 = scmp.le.s32.totalorder 1, %s8
    %p112 = scmp.lt.s32.totalorder %s8, 3
    %p113 = pnand %p111, %p112
    %p114 = pneg %p113
    // Predicated region
    $region25: #{up_forward.5} parent=5 // pred_check
      _
    $region26: #{up_forward.5} parent=5 // pred_check_branch
      %116 = sbr.rel (%p113) target = $region28
    $region27: #{up_forward.5} parent=5 // pred_region
      %s117 = ssub.s32 %s8, 1
      %p118 = scmp.lt.s32.totalorder %s13, 1
      %s119 = scalar_select %p118, %s13, 1
      %s120 = smul.addr %s119, 4
      %s121 = smul.addr %s120, 8
      %s122 = scalar_lea.vmem %s0, %s121
      %p123 = pneg %p34
      %p124 = pneg %p31
      %p125 = pneg %p55
      %p126 = pneg %p52
      %p127 = pneg %p81
      %p128 = pneg %p78
      %p129 = scmp.lt.s32.totalorder %s13, 1
      %s130 = scalar_select %p129, %s13, 1
      %s131 = smul.addr %s130, 4
      %s132 = smul.addr %s131, 8
      %s133 = scalar_lea.vmem %s2, %s132
      %p134 = scmp.lt.s32.totalorder %s13, 1
      %s135 = scalar_select %p134, %s13, 1
      %s136 = smul.addr %s135, 4
      %s137 = smul.addr %s136, 8
      %s138 = scalar_lea.vmem %s0, %s137
      %p139 = scmp.lt.s32.totalorder %s13, 1
      %s140 = scalar_select %p139, %s13, 1
      %s141 = smul.addr %s140, 4
      %s142 = smul.addr %s141, 8
      %s143 = scalar_lea.vmem %s2, %s142
      %v144 = vld [vmem:[%s138] sm:$0xff]
      %v145 = vld [vmem:[%s138 + $0x8] sm:$0xff]
      %v146 = vld [vmem:[%s138 + $0x10] sm:$0xff]
      %v147 = vld [vmem:[%s138 + $0x18] sm:$0xff]
      %v148 = vld [vmem:[%s1] sm:$0x1]
      %v149 = vlaneseq
      %v150 = vshrl.u32 %v149, 7
      %v151 = vsub.s32 0, %v150
      %v152 = vrot.slane %v148, %v151
      %v153 = vmul.f32 %v144, %v152
      %v154 = vmul.f32 %v145, %v152
      %v155 = vmul.f32 %v146, %v152
      %v156 = vmul.f32 %v147, %v152
      %v157 = vld [vmem:[%s1 + $0x1] sm:$0x1]
      %v158 = vlaneseq
      %v159 = vshrl.u32 %v158, 7
      %v160 = vsub.s32 0, %v159
      %v161 = vrot.slane %v157, %v160
      %v162 = vadd.f32 %v153, %v161
      %v163 = vadd.f32 %v154, %v161
      %v164 = vadd.f32 %v155, %v161
      %v165 = vadd.f32 %v156, %v161
      %v166 = vmax.f32 %v162, 0.0
      %v167 = vmax.f32 %v163, 0.0
      %v168 = vmax.f32 %v164, 0.0
      %v169 = vmax.f32 %v165, 0.0
      %170 = vst [vmem:[%s143] sm:$0xff] %v166
      %171 = vst [vmem:[%s143 + $0x8] sm:$0xff] %v167
      %172 = vst [vmem:[%s143 + $0x10] sm:$0xff] %v168
      %173 = vst [vmem:[%s143 + $0x18] sm:$0xff] %v169
      %p174 = scmp.lt.s32.totalorder %s13, 1
      %s175 = scalar_select %p174, %s13, 1
      %s176 = smul.addr %s175, 4
      %s177 = smul.addr %s176, 8
      %s178 = scalar_lea.vmem %s2, %s177
      // Predicated region
      $region29: #{up_forward.5} parent=27 // pred_check
        %p179 = pneg %p78
      $region30: #{up_forward.5} parent=27 // pred_check_branch
        %181 = sbr.rel (%p179) target = $region32
      $region31: #{up_forward.5} parent=27 // pred_region
        _
      $region32: #{up_forward.5} parent=27 // pred_fallthru
        _
    $region28: #{up_forward.5} parent=5 // pred_fallthru
      _
    %p182 = scmp.le.s32.totalorder 2, %s8
    // Predicated region
    $region33: #{up_forward.5} parent=5 // pred_check
      %p183 = pneg %p182
    $region34: #{up_forward.5} parent=5 // pred_check_branch
      %185 = sbr.rel (%p183) target = $region36
    $region35: #{up_forward.5} parent=5 // pred_region
      %s186 = ssub.s32 %s8, 2
      // Predicated region
      $region37: #{up_forward.5} parent=35 // pred_check
        %p187 = pneg %p84
      $region38: #{up_forward.5} parent=35 // pred_check_branch
        %189 = sbr.rel (%p187) target = $region40
      $region39: #{up_forward.5} parent=35 // pred_region
        %p190 = scmp.lt.s32.totalorder %s14, 1
        %s191 = scalar_select %p190, %s14, 1
        %s192 = smul.addr %s191, 4
        %s193 = smul.addr %s192, 8
        %s194 = scalar_lea.vmem %s2, %s193
      $region40: #{up_forward.5} parent=35 // pred_fallthru
        _
    $region36: #{up_forward.5} parent=5 // pred_fallthru
      _
  $region6: #{up_forward.5} parent=0 // loop_footer
    %s12 = sadd.s32 1, %s8
  $region7: #{up_forward.5} parent=0 // loop_footer_branch
    %7 = sbr.rel target = $region3
  $region8: #{up_forward.5} parent=0 // loop_exit
    _

// kernel: up_forward.4
$region0: #{up_forward.4}
  #allocation0 [shape = 'u32[]', space=smem, size = 0x4, offset = 0x4, fixed_abs, tag = 'smem constant byte address 0x4 - core index']
  #allocation1 [shape = 'u32[144,128]{1,0:T(1,128)}', space=vmem, size = 0x12000, scoped, tag = 'internal scratch']
  %s0 = inlined_call_operand.vmem [shape: f32[2,32,128], index: 0, kind: input, shape index: {}]
  %s1 = inlined_call_operand.vmem [shape: f32[3,136,128], index: 1, kind: input, shape index: {}]
  %s2 = inlined_call_operand.vmem [shape: f32[2,128], index: 2, kind: input, shape index: {}]
  %s3 = inlined_call_operand.vmem [shape: f32[2,32,128], index: 3, kind: output, shape index: {0}]
  %s4 = inlined_call_operand.vmem [shape: f32[2,2,128], index: 4, kind: output, shape index: {1}]
  %5 = xla_tuple %s3, %s4
  %s6 = sld [smem:[#allocation0]]
  $region53: #{up_forward.4} parent=0
    _
  %s8 = ssub.s32 1, %s6
  %s9 = scalar_select 0, %s8, %s6
  loop: start=0, step=1, limit=4
  $region2: #{up_forward.4} parent=0 // loop_pre_header
    _
  $region3: #{up_forward.4} parent=0 // loop_header
    %s11 = sphi 0, %s15
    %p12 = scmp.ge.s32.totalorder %s11, 4
    %s21 = sphi 0, %s23
    %s24 = sphi 0, %s21
    %s25 = sphi 0, %s24
    %s41 = sphi 0, %s25
    %s45 = sphi 0, %s45
    %s47 = sphi 0, %s45
    %s48 = sphi 0, %s47
    %s62 = sphi 0, %s48
    %s66 = sphi 0, %s66
    %s68 = sphi 0, %s66
    %s69 = sphi 0, %s68
    %s83 = sphi 0, %s69
    %s89 = sphi 0, %s91
    %s92 = sphi 0, %s89
    %s93 = sphi 0, %s92
    %s109 = sphi 0, %s93
    %s115 = sphi 0, %s117
    %s118 = sphi 0, %s115
    %s119 = sphi 0, %s118
    %s135 = sphi 0, %s119
  $region4: #{up_forward.4} parent=0 // loop_header_branch
    %14 = sbr.rel (%p12) target = $region8
  $region5: #{up_forward.4} parent=0 // loop_body
    %s16 = ssub.s32 %s11, 1
    %s17 = ssub.s32 %s11, 2
    %s18 = sadd.s32 %s11, 1
    %s19 = ssub.s32 %s11, %s18
    %p20 = scmp.eq.s32.totalorder %s19, 0
    %s22 = sadd.s32 %s21, 1
    %s23 = scalar_select %p20, %s21, %s22
    %p26 = pneg %p20
    %p27 = scmp.eq.s32.totalorder %s11, 1
    %p28 = por %p26, %p27
    %p29 = scmp.ne.s32.totalorder %s21, %s24
    %p30 = scmp.eq.s32.totalorder %s11, 0
    %p31 = por %p29, %p30
    %p32 = scmp.ne.s32.totalorder %s21, %s24
    %p33 = scmp.eq.s32.totalorder %s16, 1
    %p34 = por %p32, %p33
    %p35 = scmp.ne.s32.totalorder %s24, %s25
    %p36 = scmp.eq.s32.totalorder %s16, 0
    %p37 = por %p35, %p36
    %p38 = scmp.ne.s32.totalorder %s24, %s25
    %p39 = scmp.eq.s32.totalorder %s17, 1
    %p40 = por %p38, %p39
    %p42 = scmp.ne.s32.totalorder %s25, %s41
    %p43 = scmp.eq.s32.totalorder %s17, 0
    %p44 = por %p42, %p43
    %s46 = sadd.s32 %s45, 1
    %p49 = scmp.eq.s32.totalorder %s11, 1
    %p50 = scmp.ne.s32.totalorder %s45, %s47
    %p51 = scmp.eq.s32.totalorder %s11, 0
    %p52 = por %p50, %p51
    %p53 = scmp.ne.s32.totalorder %s45, %s47
    %p54 = scmp.eq.s32.totalorder %s16, 1
    %p55 = por %p53, %p54
    %p56 = scmp.ne.s32.totalorder %s47, %s48
    %p57 = scmp.eq.s32.totalorder %s16, 0
    %p58 = por %p56, %p57
    %p59 = scmp.ne.s32.totalorder %s47, %s48
    %p60 = scmp.eq.s32.totalorder %s17, 1
    %p61 = por %p59, %p60
    %p63 = scmp.ne.s32.totalorder %s48, %s62
    %p64 = scmp.eq.s32.totalorder %s17, 0
    %p65 = por %p63, %p64
    %s67 = sadd.s32 %s66, 1
    %p70 = scmp.eq.s32.totalorder %s11, 1
    %p71 = scmp.ne.s32.totalorder %s66, %s68
    %p72 = scmp.eq.s32.totalorder %s11, 0
    %p73 = por %p71, %p72
    %p74 = scmp.ne.s32.totalorder %s66, %s68
    %p75 = scmp.eq.s32.totalorder %s16, 1
    %p76 = por %p74, %p75
    %p77 = scmp.ne.s32.totalorder %s68, %s69
    %p78 = scmp.eq.s32.totalorder %s16, 0
    %p79 = por %p77, %p78
    %p80 = scmp.ne.s32.totalorder %s68, %s69
    %p81 = scmp.eq.s32.totalorder %s17, 1
    %p82 = por %p80, %p81
    %p84 = scmp.ne.s32.totalorder %s69, %s83
    %p85 = scmp.eq.s32.totalorder %s17, 0
    %p86 = por %p84, %p85
    %s87 = ssub.s32 %s11, %s18
    %p88 = scmp.eq.s32.totalorder %s87, 0
    %s90 = sadd.s32 %s89, 1
    %s91 = scalar_select %p88, %s89, %s90
    %p94 = pneg %p88
    %p95 = scmp.eq.s32.totalorder %s11, 1
    %p96 = por %p94, %p95
    %p97 = scmp.ne.s32.totalorder %s89, %s92
    %p98 = scmp.eq.s32.totalorder %s11, 0
    %p99 = por %p97, %p98
    %p100 = scmp.ne.s32.totalorder %s89, %s92
    %p101 = scmp.eq.s32.totalorder %s16, 1
    %p102 = por %p100, %p101
    %p103 = scmp.ne.s32.totalorder %s92, %s93
    %p104 = scmp.eq.s32.totalorder %s16, 0
    %p105 = por %p103, %p104
    %p106 = scmp.ne.s32.totalorder %s92, %s93
    %p107 = scmp.eq.s32.totalorder %s17, 1
    %p108 = por %p106, %p107
    %p110 = scmp.ne.s32.totalorder %s93, %s109
    %p111 = scmp.eq.s32.totalorder %s17, 0
    %p112 = por %p110, %p111
    %s113 = ssub.s32 %s11, %s18
    %p114 = scmp.eq.s32.totalorder %s113, 0
    %s116 = sadd.s32 %s115, 1
    %s117 = scalar_select %p114, %s115, %s116
    %p120 = pneg %p114
    %p121 = scmp.eq.s32.totalorder %s11, 1
    %p122 = por %p120, %p121
    %p123 = scmp.ne.s32.totalorder %s115, %s118
    %p124 = scmp.eq.s32.totalorder %s11, 0
    %p125 = por %p123, %p124
    %p126 = scmp.ne.s32.totalorder %s115, %s118
    %p127 = scmp.eq.s32.totalorder %s16, 1
    %p128 = por %p126, %p127
    %p129 = scmp.ne.s32.totalorder %s118, %s119
    %p130 = scmp.eq.s32.totalorder %s16, 0
    %p131 = por %p129, %p130
    %p132 = scmp.ne.s32.totalorder %s118, %s119
    %p133 = scmp.eq.s32.totalorder %s17, 1
    %p134 = por %p132, %p133
    %p136 = scmp.ne.s32.totalorder %s119, %s135
    %p137 = scmp.eq.s32.totalorder %s17, 0
    %p138 = por %p136, %p137
    %p139 = scmp.le.s32.totalorder 1, %s11
    %p140 = scmp.lt.s32.totalorder %s11, 3
    %p141 = pnand %p139, %p140
    %p142 = pneg %p141
    // Predicated region
    $region9: #{up_forward.4} parent=5 // pred_check
      _
    $region10: #{up_forward.4} parent=5 // pred_check_branch
      %144 = sbr.rel (%p141) target = $region12
    $region11: #{up_forward.4} parent=5 // pred_region
      %s145 = ssub.s32 %s11, 1
      // Predicated region
      $region13: #{up_forward.4} parent=11 // pred_check
        %p146 = pneg %p58
      $region14: #{up_forward.4} parent=11 // pred_check_branch
        %148 = sbr.rel (%p146) target = $region16
      $region15: #{up_forward.4} parent=11 // pred_region
        _
      $region16: #{up_forward.4} parent=11 // pred_fallthru
        _
      // Predicated region
      $region17: #{up_forward.4} parent=11 // pred_check
        %p149 = pneg %p79
      $region18: #{up_forward.4} parent=11 // pred_check_branch
        %151 = sbr.rel (%p149) target = $region20
      $region19: #{up_forward.4} parent=11 // pred_region
        _
      $region20: #{up_forward.4} parent=11 // pred_fallthru
        _
    $region12: #{up_forward.4} parent=5 // pred_fallthru
      _
    %p152 = scmp.lt.s32.totalorder %s11, 2
    // Predicated region
    $region21: #{up_forward.4} parent=5 // pred_check
      %p153 = pneg %p152
    $region22: #{up_forward.4} parent=5 // pred_check_branch
      %155 = sbr.rel (%p153) target = $region24
    $region23: #{up_forward.4} parent=5 // pred_region
      // Predicated region
      $region25: #{up_forward.4} parent=23 // pred_check
        %p156 = pneg %p31
      $region26: #{up_forward.4} parent=23 // pred_check_branch
        %158 = sbr.rel (%p156) target = $region28
      $region27: #{up_forward.4} parent=23 // pred_region
        %p159 = scmp.lt.s32.totalorder %s11, 1
        %s160 = scalar_select %p159, %s11, 1
        %s161 = smul.addr %s160, 4
        %s162 = smul.addr %s161, 8
        %s163 = scalar_lea.vmem %s0, %s162
      $region28: #{up_forward.4} parent=23 // pred_fallthru
        _
    $region24: #{up_forward.4} parent=5 // pred_fallthru
      _
    %p164 = scmp.le.s32.totalorder 1, %s11
    %p165 = scmp.lt.s32.totalorder %s11, 3
    %p166 = pnand %p164, %p165
    %p167 = pneg %p166
    // Predicated region
    $region29: #{up_forward.4} parent=5 // pred_check
      _
    $region30: #{up_forward.4} parent=5 // pred_check_branch
      %169 = sbr.rel (%p166) target = $region32
    $region31: #{up_forward.4} parent=5 // pred_region
      %s170 = ssub.s32 %s11, 1
      %p171 = scmp.lt.s32.totalorder %s16, 1
      %s172 = scalar_select %p171, %s16, 1
      %s173 = smul.addr %s172, 4
      %s174 = smul.addr %s173, 8
      %s175 = scalar_lea.vmem %s0, %s174
      %p176 = pneg %p37
      %p177 = pneg %p34
      %p178 = pneg %p58
      %p179 = pneg %p55
      %p180 = pneg %p79
      %p181 = pneg %p76
      %p182 = pneg %p105
      %p183 = pneg %p102
      %p184 = scmp.lt.s32.totalorder %s16, 1
      %s185 = scalar_select %p184, %s16, 1
      %s186 = smul.addr %s185, 4
      %s187 = smul.addr %s186, 8
      %s188 = scalar_lea.vmem %s3, %s187
      %p189 = pneg %p131
      %p190 = pneg %p128
      %p191 = scmp.lt.s32.totalorder %s16, 1
      %s192 = scalar_select %p191, %s16, 1
      %s193 = smul.addr %s192, 2
      %s194 = scalar_lea.vmem %s4, %s193
      %p195 = scmp.lt.s32.totalorder %s16, 1
      %s196 = scalar_select %p195, %s16, 1
      %s197 = smul.addr %s196, 4
      %s198 = smul.addr %s197, 8
      %s199 = scalar_lea.vmem %s0, %s198
      %p200 = scmp.lt.s32.totalorder %s16, 1
      %s201 = scalar_select %p200, %s16, 1
      %s202 = smul.addr %s201, 4
      %s203 = smul.addr %s202, 8
      %s204 = scalar_lea.vmem %s3, %s203
      %p205 = scmp.lt.s32.totalorder %s16, 1
      %s206 = scalar_select %p205, %s16, 1
      %s207 = smul.addr %s206, 2
      %s208 = scalar_lea.vmem %s4, %s207
      %v209 = vld [vmem:[%s199] sm:$0xff]
      %v210 = vld [vmem:[%s199 + $0x8] sm:$0xff]
      %v211 = vld [vmem:[%s199 + $0x10] sm:$0xff]
      %v212 = vld [vmem:[%s199 + $0x18] sm:$0xff]
      %v213 = vld [vmem:[%s2] sm:$0x1]
      %v214 = vlaneseq
      %v215 = vshrl.u32 %v214, 7
      %v216 = vsub.s32 0, %v215
      %v217 = vrot.slane %v213, %v216
      %v218 = vmul.f32 %v209, %v217
      %v219 = vmul.f32 %v210, %v217
      %v220 = vmul.f32 %v211, %v217
      %v221 = vmul.f32 %v212, %v217
      %v222 = vld [vmem:[%s2 + $0x1] sm:$0x1]
      %v223 = vlaneseq
      %v224 = vshrl.u32 %v223, 7
      %v225 = vsub.s32 0, %v224
      %v226 = vrot.slane %v222, %v225
      %v227 = vadd.f32 %v218, %v226
      %v228 = vadd.f32 %v219, %v226
      %v229 = vadd.f32 %v220, %v226
      %v230 = vadd.f32 %v221, %v226
      %v231 = vmax.f32 %v227, 0.0
      %v232 = vmax.f32 %v228, 0.0
      %v233 = vmax.f32 %v229, 0.0
      %v234 = vmax.f32 %v230, 0.0
      %239 = vrot.lane.b32.xlu0 %v231, 4
      %v240 = vpop.permute.xlu0 %239
      %241 = vrot.lane.b32.xlu0 %v232, 4
      %v242 = vpop.permute.xlu0 %241
      %243 = vrot.lane.b32.xlu0 %v233, 4
      %v244 = vpop.permute.xlu0 %243
      %245 = vrot.lane.b32.xlu0 %v234, 4
      %v246 = vpop.permute.xlu0 %245
      %vm251 = vcmask 31744
      %v252 = vsel %vm251, 0.0, %v240
      %v253 = vsel %vm251, 0.0, %v242
      %v254 = vsel %vm251, 0.0, %v244
      %v255 = vsel %vm251, 0.0, %v246
      %v256 = vsel %vm251, %v240, 0.0
      %v257 = vsel %vm251, %v242, 0.0
      %v258 = vsel %vm251, %v244, 0.0
      %v259 = vsel %vm251, %v246, 0.0
      %vm268 = vcmask 1040384
      %v269 = vrot.slane %v252, 7
      %v270 = vrot.slane %v256, 7
      %v271 = vrot.slane %v253, 7
      %v272 = vsel %vm268, %v269, %v271
      %v273 = vrot.slane %v257, 7
      %v274 = vsel %vm268, %v270, %v273
      %v275 = vrot.slane %v254, 7
      %v276 = vsel %vm268, %v271, %v275
      %v277 = vrot.slane %v258, 7
      %v278 = vsel %vm268, %v273, %v277
      %v279 = vrot.slane %v255, 7
      %v280 = vsel %vm268, %v275, %v279
      %v281 = vrot.slane %v259, 7
      %v282 = vsel %vm268, %v277, %v281
      %v290 = vsel %vm268, 0.0, %v269
      %v291 = vsel %vm268, 0.0, %v270
      %v292 = vsel %vm268, %v279, 0.0
      %v293 = vsel %vm268, %v281, 0.0
      %v294 = vld [vmem:[%s1] sm:$0xff]
      %v295 = vld [vmem:[%s1 + $0x8] sm:$0xff]
      %v296 = vld [vmem:[%s1 + $0x10] sm:$0xff]
      %v297 = vld [vmem:[%s1 + $0x18] sm:$0xff]
      %v298 = vld [vmem:[%s1 + $0x20] sm:$0xff]
      %v299 = vld [vmem:[%s1 + $0x28] sm:$0xff]
      %v300 = vld [vmem:[%s1 + $0x30] sm:$0xff]
      %v301 = vld [vmem:[%s1 + $0x38] sm:$0xff]
      %v302 = vld [vmem:[%s1 + $0x40] sm:$0xff]
      %v303 = vld [vmem:[%s1 + $0x48] sm:$0xff]
      %v304 = vld [vmem:[%s1 + $0x50] sm:$0xff]
      %v305 = vld [vmem:[%s1 + $0x58] sm:$0xff]
      %v306 = vld [vmem:[%s1 + $0x60] sm:$0xff]
      %v307 = vld [vmem:[%s1 + $0x68] sm:$0xff]
      %v308 = vld [vmem:[%s1 + $0x70] sm:$0xff]
      %v309 = vld [vmem:[%s1 + $0x78] sm:$0xff]
      %v310 = vld [vmem:[%s1 + $0x80] sm:$0xff]
      %s311 = scalar_lea.vmem %s1, 136
      %v312 = vld [vmem:[%s311] sm:$0xff]
      %v313 = vld [vmem:[%s311 + $0x8] sm:$0xff]
      %v314 = vld [vmem:[%s311 + $0x10] sm:$0xff]
      %v315 = vld [vmem:[%s311 + $0x18] sm:$0xff]
      %v316 = vld [vmem:[%s311 + $0x20] sm:$0xff]
      %v317 = vld [vmem:[%s311 + $0x28] sm:$0xff]
      %v318 = vld [vmem:[%s311 + $0x30] sm:$0xff]
      %v319 = vld [vmem:[%s311 + $0x38] sm:$0xff]
      %v320 = vld [vmem:[%s311 + $0x40] sm:$0xff]
      %v321 = vld [vmem:[%s311 + $0x48] sm:$0xff]
      %v322 = vld [vmem:[%s311 + $0x50] sm:$0xff]
      %v323 = vld [vmem:[%s311 + $0x58] sm:$0xff]
      %v324 = vld [vmem:[%s311 + $0x60] sm:$0xff]
      %v325 = vld [vmem:[%s311 + $0x68] sm:$0xff]
      %v326 = vld [vmem:[%s311 + $0x70] sm:$0xff]
      %v327 = vld [vmem:[%s311 + $0x78] sm:$0xff]
      %v328 = vld [vmem:[%s311 + $0x80] sm:$0xff]
      %vm333 = vcmask 1046528
      %v334 = vrot.slane %v290, 1
      %v335 = vrot.slane %v272, 1
      %v336 = vsel %vm333, %v334, %v335
      %v337 = vrot.slane %v291, 1
      %v338 = vrot.slane %v274, 1
      %v339 = vsel %vm333, %v337, %v338
      %v340 = vrot.slane %v276, 1
      %v341 = vsel %vm333, %v335, %v340
      %v342 = vrot.slane %v278, 1
      %v343 = vsel %vm333, %v338, %v342
      %v344 = vrot.slane %v280, 1
      %v345 = vsel %vm333, %v340, %v344
      %v346 = vrot.slane %v282, 1
      %v347 = vsel %vm333, %v342, %v346
      %v348 = vrot.slane %v292, 1
      %v349 = vsel %vm333, %v344, %v348
      %v350 = vrot.slane %v293, 1
      %v351 = vsel %vm333, %v346, %v350
      %vm356 = vcmask 64512
      %v357 = vsel %vm356, %v339, 0
      %v359 = vsel %vm356, %v343, 0
      %v361 = vsel %vm356, %v347, 0
      %v363 = vsel %vm356, %v351, 0
      %365 = vmatprep.subr.mxu0 0.0
      %366 = vmatpush1.msra.mxu0 %v327
      %367 = vmatprep.subr.mxu0 0.0
      %368 = vmatpush1.msra.mxu0 %v326
      %369 = vmatprep.subr.mxu0 0.0
      %370 = vmatpush1.msra.mxu0 %v325
      %371 = vmatprep.subr.mxu0 0.0
      %372 = vmatpush1.msra.mxu0 %v324
      %373 = vmatprep.subr.mxu0 0.0
      %374 = vmatpush1.msra.mxu0 %v323
      %375 = vmatprep.subr.mxu0 0.0
      %376 = vmatpush1.msra.mxu0 %v322
      %377 = vmatprep.subr.mxu0 0.0
      %378 = vmatpush1.msra.mxu0 %v321
      %379 = vmatprep.subr.mxu0 0.0
      %380 = vmatpush1.msra.mxu0 %v320
      %381 = vmatprep.subr.mxu0 0.0
      %382 = vmatpush1.msra.mxu0 %v319
      %383 = vmatprep.subr.mxu0 0.0
      %384 = vmatpush1.msra.mxu0 %v318
      %385 = vmatprep.subr.mxu0 0.0
      %386 = vmatpush1.msra.mxu0 %v317
      %387 = vmatprep.subr.mxu0 0.0
      %388 = vmatpush1.msra.mxu0 %v316
      %389 = vmatprep.subr.mxu0 0.0
      %390 = vmatpush1.msra.mxu0 %v315
      %391 = vmatprep.subr.mxu0 0.0
      %392 = vmatpush1.msra.mxu0 %v314
      %393 = vmatprep.subr.mxu0 0.0
      %394 = vmatpush1.msra.mxu0 %v313
      %395 = vmatprep.subr.mxu0 0.0
      %396 = vmatpush1.msra.mxu0 %v312
      %397 = vmatprep.subr.mxu0 0.0
      %398 = vmatpush2.msra.mxu0 0.0
      %399 = vmatprep.subr.mxu0 0.0
      %400 = vmatpush2.msra.mxu0 0.0
      %401 = vmatprep.subr.mxu0 0.0
      %402 = vmatpush2.msra.mxu0 0.0
      %403 = vmatprep.subr.mxu0 0.0
      %404 = vmatpush2.msra.mxu0 0.0
      %405 = vmatprep.subr.mxu0 0.0
      %406 = vmatpush2.msra.mxu0 0.0
      %407 = vmatprep.subr.mxu0 0.0
      %408 = vmatpush2.msra.mxu0 0.0
      %409 = vmatprep.subr.mxu0 0.0
      %410 = vmatpush2.msra.mxu0 0.0
      %411 = vmatprep.subr.mxu0 0.0
      %412 = vmatpush2.msra.mxu0 0.0
      %413 = vmatprep.subr.mxu0 0.0
      %414 = vmatpush2.msra.mxu0 0.0
      %415 = vmatprep.subr.mxu0 0.0
      %416 = vmatpush2.msra.mxu0 0.0
      %417 = vmatprep.subr.mxu0 0.0
      %418 = vmatpush2.msra.mxu0 0.0
      %419 = vmatprep.subr.mxu0 0.0
      %420 = vmatpush2.msra.mxu0 0.0
      %421 = vmatprep.subr.mxu0 0.0
      %422 = vmatpush2.msra.mxu0 0.0
      %423 = vmatprep.subr.mxu0 0.0
      %424 = vmatpush2.msra.mxu0 0.0
      %425 = vmatprep.subr.mxu0 0.0
      %426 = vmatpush2.msra.mxu0 0.0
      %427 = vmatprep.subr.mxu0 0.0
      %428 = vmatpush2.msra.mxu0 %v328
      %429 = vmatprep.mubr.f32.mxu0 %v357
      %430 = vmatmul.mubr.f32.gmra.mxu0 %v336
      %v431 = vpop.f32.mrf.mxu0
      %v432 = vadd.f32 0.0, %v431
      %v433 = vpop.f32.mrf.mxu0
      %434 = vmatprep.mubr.f32.mxu0 %v359
      %435 = vmatmul.mubr.f32.gmra.mxu0 %v341
      %v436 = vpop.f32.mrf.mxu0
      %v437 = vadd.f32 0.0, %v436
      %v438 = vpop.f32.mrf.mxu0
      %439 = vmatprep.mubr.f32.mxu0 %v361
      %440 = vmatmul.mubr.f32.gmra.mxu0 %v345
      %v441 = vpop.f32.mrf.mxu0
      %v442 = vadd.f32 0.0, %v441
      %v443 = vpop.f32.mrf.mxu0
      %444 = vmatprep.mubr.f32.mxu0 %v363
      %445 = vmatmul.mubr.f32.gmra.mxu0 %v349
      %v446 = vpop.f32.mrf.mxu0
      %v447 = vadd.f32 0.0, %v446
      %v448 = vpop.f32.mrf.mxu0
      %449 = vdwg.mxu0
      %v450 = vsel %vm356, %v291, 0
      %v452 = vsel %vm356, %v274, 0
      %v454 = vsel %vm356, %v278, 0
      %v456 = vsel %vm356, %v282, 0
      %458 = vmatprep.subr.mxu0 0.0
      %459 = vmatpush1.msra.mxu0 %v309
      %460 = vmatprep.subr.mxu0 0.0
      %461 = vmatpush1.msra.mxu0 %v308
      %462 = vmatprep.subr.mxu0 0.0
      %463 = vmatpush1.msra.mxu0 %v307
      %464 = vmatprep.subr.mxu0 0.0
      %465 = vmatpush1.msra.mxu0 %v306
      %466 = vmatprep.subr.mxu0 0.0
      %467 = vmatpush1.msra.mxu0 %v305
      %468 = vmatprep.subr.mxu0 0.0
      %469 = vmatpush1.msra.mxu0 %v304
      %470 = vmatprep.subr.mxu0 0.0
      %471 = vmatpush1.msra.mxu0 %v303
      %472 = vmatprep.subr.mxu0 0.0
      %473 = vmatpush1.msra.mxu0 %v302
      %474 = vmatprep.subr.mxu0 0.0
      %475 = vmatpush1.msra.mxu0 %v301
      %476 = vmatprep.subr.mxu0 0.0
      %477 = vmatpush1.msra.mxu0 %v300
      %478 = vmatprep.subr.mxu0 0.0
      %479 = vmatpush1.msra.mxu0 %v299
      %480 = vmatprep.subr.mxu0 0.0
      %481 = vmatpush1.msra.mxu0 %v298
      %482 = vmatprep.subr.mxu0 0.0
      %483 = vmatpush1.msra.mxu0 %v297
      %484 = vmatprep.subr.mxu0 0.0
      %485 = vmatpush1.msra.mxu0 %v296
      %486 = vmatprep.subr.mxu0 0.0
      %487 = vmatpush1.msra.mxu0 %v295
      %488 = vmatprep.subr.mxu0 0.0
      %489 = vmatpush1.msra.mxu0 %v294
      %490 = vmatprep.subr.mxu0 0.0
      %491 = vmatpush2.msra.mxu0 0.0
      %492 = vmatprep.subr.mxu0 0.0
      %493 = vmatpush2.msra.mxu0 0.0
      %494 = vmatprep.subr.mxu0 0.0
      %495 = vmatpush2.msra.mxu0 0.0
      %496 = vmatprep.subr.mxu0 0.0
      %497 = vmatpush2.msra.mxu0 0.0
      %498 = vmatprep.subr.mxu0 0.0
      %499 = vmatpush2.msra.mxu0 0.0
      %500 = vmatprep.subr.mxu0 0.0
      %501 = vmatpush2.msra.mxu0 0.0
      %502 = vmatprep.subr.mxu0 0.0
      %503 = vmatpush2.msra.mxu0 0.0
      %504 = vmatprep.subr.mxu0 0.0
      %505 = vmatpush2.msra.mxu0 0.0
      %506 = vmatprep.subr.mxu0 0.0
      %507 = vmatpush2.msra.mxu0 0.0
      %508 = vmatprep.subr.mxu0 0.0
      %509 = vmatpush2.msra.mxu0 0.0
      %510 = vmatprep.subr.mxu0 0.0
      %511 = vmatpush2.msra.mxu0 0.0
      %512 = vmatprep.subr.mxu0 0.0
      %513 = vmatpush2.msra.mxu0 0.0
      %514 = vmatprep.subr.mxu0 0.0
      %515 = vmatpush2.msra.mxu0 0.0
      %516 = vmatprep.subr.mxu0 0.0
      %517 = vmatpush2.msra.mxu0 0.0
      %518 = vmatprep.subr.mxu0 0.0
      %519 = vmatpush2.msra.mxu0 0.0
      %520 = vmatprep.subr.mxu0 0.0
      %521 = vmatpush2.msra.mxu0 %v310
      %522 = vmatprep.mubr.f32.mxu0 %v450
      %523 = vmatmul.mubr.f32.gmra.mxu0 %v290
      %v524 = vpop.f32.mrf.mxu0
      %v525 = vadd.f32 %v432, %v524
      %v526 = vpop.f32.mrf.mxu0
      %527 = vmatprep.mubr.f32.mxu0 %v452
      %528 = vmatmul.mubr.f32.gmra.mxu0 %v272
      %v529 = vpop.f32.mrf.mxu0
      %v530 = vadd.f32 %v437, %v529
      %v531 = vpop.f32.mrf.mxu0
      %532 = vmatprep.mubr.f32.mxu0 %v454
      %533 = vmatmul.mubr.f32.gmra.mxu0 %v276
      %v534 = vpop.f32.mrf.mxu0
      %v535 = vadd.f32 %v442, %v534
      %v536 = vpop.f32.mrf.mxu0
      %537 = vmatprep.mubr.f32.mxu0 %v456
      %538 = vmatmul.mubr.f32.gmra.mxu0 %v280
      %v539 = vpop.f32.mrf.mxu0
      %v540 = vadd.f32 %v447, %v539
      %v541 = vpop.f32.mrf.mxu0
      %542 = vdwg.mxu0
      %s543 = scalar_lea.vmem %s1, 272
      %v544 = vld [vmem:[%s543] sm:$0xff]
      %v545 = vld [vmem:[%s543 + $0x8] sm:$0xff]
      %v546 = vld [vmem:[%s543 + $0x10] sm:$0xff]
      %v547 = vld [vmem:[%s543 + $0x18] sm:$0xff]
      %v548 = vld [vmem:[%s543 + $0x20] sm:$0xff]
      %v549 = vld [vmem:[%s543 + $0x28] sm:$0xff]
      %v550 = vld [vmem:[%s543 + $0x30] sm:$0xff]
      %v551 = vld [vmem:[%s543 + $0x38] sm:$0xff]
      %v552 = vld [vmem:[%s543 + $0x40] sm:$0xff]
      %v553 = vld [vmem:[%s543 + $0x48] sm:$0xff]
      %v554 = vld [vmem:[%s543 + $0x50] sm:$0xff]
      %v555 = vld [vmem:[%s543 + $0x58] sm:$0xff]
      %v556 = vld [vmem:[%s543 + $0x60] sm:$0xff]
      %v557 = vld [vmem:[%s543 + $0x68] sm:$0xff]
      %v558 = vld [vmem:[%s543 + $0x70] sm:$0xff]
      %v559 = vld [vmem:[%s543 + $0x78] sm:$0xff]
      %v560 = vld [vmem:[%s543 + $0x80] sm:$0xff]
      %vm561 = vcmask 1045504
      %v562 = vrot.slane %v290, 2
      %v563 = vrot.slane %v272, 2
      %v564 = vsel %vm561, %v562, %v563
      %v565 = vrot.slane %v291, 2
      %v566 = vrot.slane %v274, 2
      %v567 = vsel %vm561, %v565, %v566
      %v568 = vrot.slane %v276, 2
      %v569 = vsel %vm561, %v563, %v568
      %v570 = vrot.slane %v278, 2
      %v571 = vsel %vm561, %v566, %v570
      %v572 = vrot.slane %v280, 2
      %v573 = vsel %vm561, %v568, %v572
      %v574 = vrot.slane %v282, 2
      %v575 = vsel %vm561, %v570, %v574
      %v576 = vrot.slane %v292, 2
      %v577 = vsel %vm561, %v572, %v576
      %v578 = vrot.slane %v293, 2
      %v579 = vsel %vm561, %v574, %v578
      %v584 = vsel %vm356, %v567, 0
      %v586 = vsel %vm356, %v571, 0
      %v588 = vsel %vm356, %v575, 0
      %v590 = vsel %vm356, %v579, 0
      %592 = vmatprep.subr.mxu0 0.0
      %593 = vmatpush1.msra.mxu0 %v559
      %594 = vmatprep.subr.mxu0 0.0
      %595 = vmatpush1.msra.mxu0 %v558
      %596 = vmatprep.subr.mxu0 0.0
      %597 = vmatpush1.msra.mxu0 %v557
      %598 = vmatprep.subr.mxu0 0.0
      %599 = vmatpush1.msra.mxu0 %v556
      %600 = vmatprep.subr.mxu0 0.0
      %601 = vmatpush1.msra.mxu0 %v555
      %602 = vmatprep.subr.mxu0 0.0
      %603 = vmatpush1.msra.mxu0 %v554
      %604 = vmatprep.subr.mxu0 0.0
      %605 = vmatpush1.msra.mxu0 %v553
      %606 = vmatprep.subr.mxu0 0.0
      %607 = vmatpush1.msra.mxu0 %v552
      %608 = vmatprep.subr.mxu0 0.0
      %609 = vmatpush1.msra.mxu0 %v551
      %610 = vmatprep.subr.mxu0 0.0
      %611 = vmatpush1.msra.mxu0 %v550
      %612 = vmatprep.subr.mxu0 0.0
      %613 = vmatpush1.msra.mxu0 %v549
      %614 = vmatprep.subr.mxu0 0.0
      %615 = vmatpush1.msra.mxu0 %v548
      %616 = vmatprep.subr.mxu0 0.0
      %617 = vmatpush1.msra.mxu0 %v547
      %618 = vmatprep.subr.mxu0 0.0
      %619 = vmatpush1.msra.mxu0 %v546
      %620 = vmatprep.subr.mxu0 0.0
      %621 = vmatpush1.msra.mxu0 %v545
      %622 = vmatprep.subr.mxu0 0.0
      %623 = vmatpush1.msra.mxu0 %v544
      %624 = vmatprep.subr.mxu0 0.0
      %625 = vmatpush2.msra.mxu0 0.0
      %626 = vmatprep.subr.mxu0 0.0
      %627 = vmatpush2.msra.mxu0 0.0
      %628 = vmatprep.subr.mxu0 0.0
      %629 = vmatpush2.msra.mxu0 0.0
      %630 = vmatprep.subr.mxu0 0.0
      %631 = vmatpush2.msra.mxu0 0.0
      %632 = vmatprep.subr.mxu0 0.0
      %633 = vmatpush2.msra.mxu0 0.0
      %634 = vmatprep.subr.mxu0 0.0
      %635 = vmatpush2.msra.mxu0 0.0
      %636 = vmatprep.subr.mxu0 0.0
      %637 = vmatpush2.msra.mxu0 0.0
      %638 = vmatprep.subr.mxu0 0.0
      %639 = vmatpush2.msra.mxu0 0.0
      %640 = vmatprep.subr.mxu0 0.0
      %641 = vmatpush2.msra.mxu0 0.0
      %642 = vmatprep.subr.mxu0 0.0
      %643 = vmatpush2.msra.mxu0 0.0
      %644 = vmatprep.subr.mxu0 0.0
      %645 = vmatpush2.msra.mxu0 0.0
      %646 = vmatprep.subr.mxu0 0.0
      %647 = vmatpush2.msra.mxu0 0.0
      %648 = vmatprep.subr.mxu0 0.0
      %649 = vmatpush2.msra.mxu0 0.0
      %650 = vmatprep.subr.mxu0 0.0
      %651 = vmatpush2.msra.mxu0 0.0
      %652 = vmatprep.subr.mxu0 0.0
      %653 = vmatpush2.msra.mxu0 0.0
      %654 = vmatprep.subr.mxu0 0.0
      %655 = vmatpush2.msra.mxu0 %v560
      %656 = vmatprep.mubr.f32.mxu0 %v584
      %657 = vmatmul.mubr.f32.gmra.mxu0 %v564
      %v658 = vpop.f32.mrf.mxu0
      %v659 = vadd.f32 0.0, %v658
      %v660 = vpop.f32.mrf.mxu0
      %661 = vmatprep.mubr.f32.mxu0 %v586
      %662 = vmatmul.mubr.f32.gmra.mxu0 %v569
      %v663 = vpop.f32.mrf.mxu0
      %v664 = vadd.f32 0.0, %v663
      %v665 = vpop.f32.mrf.mxu0
      %666 = vmatprep.mubr.f32.mxu0 %v588
      %667 = vmatmul.mubr.f32.gmra.mxu0 %v573
      %v668 = vpop.f32.mrf.mxu0
      %v669 = vadd.f32 0.0, %v668
      %v670 = vpop.f32.mrf.mxu0
      %671 = vmatprep.mubr.f32.mxu0 %v590
      %672 = vmatmul.mubr.f32.gmra.mxu0 %v577
      %v673 = vpop.f32.mrf.mxu0
      %v674 = vadd.f32 0.0, %v673
      %v675 = vpop.f32.mrf.mxu0
      %676 = vdwg.mxu0
      %v677 = vadd.f32 %v525, %v659
      %v678 = vadd.f32 %v530, %v664
      %v679 = vadd.f32 %v535, %v669
      %v680 = vadd.f32 %v540, %v674
      %681 = vst [vmem:[%s204] sm:$0xff] %v677
      %682 = vst [vmem:[%s204 + $0x8] sm:$0xff] %v678
      %683 = vst [vmem:[%s204 + $0x10] sm:$0xff] %v679
      %684 = vst [vmem:[%s204 + $0x18] sm:$0xff] %v680
      %v685 = vadd.f32 %v677, %v678
      %v686 = vadd.f32 %v685, %v679
      %v687 = vadd.f32 %v686, %v680
      %v688 = vrot.slane %v687, 4
      %v689 = vadd.f32 %v687, %v688
      %v690 = vrot.slane %v689, 2
      %v691 = vadd.f32 %v689, %v690
      %v692 = vrot.slane %v691, 1
      %v693 = vadd.f32 %v691, %v692
      %694 = vst [vmem:[%s208] sm:$0x1] %v693
      %v695 = vmul.f32 %v677, %v677
      %v696 = vmul.f32 %v678, %v678
      %v697 = vmul.f32 %v679, %v679
      %v698 = vmul.f32 %v680, %v680
      %v699 = vadd.f32 %v695, %v696
      %v700 = vadd.f32 %v699, %v697
      %v701 = vadd.f32 %v700, %v698
      %v702 = vrot.slane %v701, 4
      %v703 = vadd.f32 %v701, %v702
      %v704 = vrot.slane %v703, 2
      %v705 = vadd.f32 %v703, %v704
      %v706 = vrot.slane %v705, 1
      %v707 = vadd.f32 %v705, %v706
      %708 = vst [vmem:[%s208 + $0x1] sm:$0x1] %v707
      %p709 = scmp.lt.s32.totalorder %s16, 1
      %s710 = scalar_select %p709, %s16, 1
      %s711 = smul.addr %s710, 4
      %s712 = smul.addr %s711, 8
      %s713 = scalar_lea.vmem %s3, %s712
      %p714 = scmp.lt.s32.totalorder %s16, 1
      %s715 = scalar_select %p714, %s16, 1
      %s716 = smul.addr %s715, 2
      %s717 = scalar_lea.vmem %s4, %s716
      // Predicated region
      $region33: #{up_forward.4} parent=31 // pred_check
        %p718 = pneg %p102
      $region34: #{up_forward.4} parent=31 // pred_check_branch
        %720 = sbr.rel (%p718) target = $region36
      $region35: #{up_forward.4} parent=31 // pred_region
        _
      $region36: #{up_forward.4} parent=31 // pred_fallthru
        _
      // Predicated region
      $region37: #{up_forward.4} parent=31 // pred_check
        %p721 = pneg %p128
      $region38: #{up_forward.4} parent=31 // pred_check_branch
        %723 = sbr.rel (%p721) target = $region40
      $region39: #{up_forward.4} parent=31 // pred_region
        _
      $region40: #{up_forward.4} parent=31 // pred_fallthru
        _
    $region32: #{up_forward.4} parent=5 // pred_fallthru
      _
    %p724 = scmp.le.s32.totalorder 2, %s11
    // Predicated region
    $region41: #{up_forward.4} parent=5 // pred_check
      %p725 = pneg %p724
    $region42: #{up_forward.4} parent=5 // pred_check_branch
      %727 = sbr.rel (%p725) target = $region44
    $region43: #{up_forward.4} parent=5 // pred_region
      %s728 = ssub.s32 %s11, 2
      // Predicated region
      $region45: #{up_forward.4} parent=43 // pred_check
        %p729 = pneg %p108
      $region46: #{up_forward.4} parent=43 // pred_check_branch
        %731 = sbr.rel (%p729) target = $region48
      $region47: #{up_forward.4} parent=43 // pred_region
        %p732 = scmp.lt.s32.totalorder %s17, 1
        %s733 = scalar_select %p732, %s17, 1
        %s734 = smul.addr %s733, 4
        %s735 = smul.addr %s734, 8
        %s736 = scalar_lea.vmem %s3, %s735
      $region48: #{up_forward.4} parent=43 // pred_fallthru
        _
      // Predicated region
      $region49: #{up_forward.4} parent=43 // pred_check
        %p737 = pneg %p134
      $region50: #{up_forward.4} parent=43 // pred_check_branch
        %739 = sbr.rel (%p737) target = $region52
      $region51: #{up_forward.4} parent=43 // pred_region
        %p740 = scmp.lt.s32.totalorder %s17, 1
        %s741 = scalar_select %p740, %s17, 1
        %s742 = smul.addr %s741, 2
        %s743 = scalar_lea.vmem %s4, %s742
      $region52: #{up_forward.4} parent=43 // pred_fallthru
        _
    $region44: #{up_forward.4} parent=5 // pred_fallthru
      _
  $region6: #{up_forward.4} parent=0 // loop_footer
    %s15 = sadd.s32 1, %s11
  $region7: #{up_forward.4} parent=0 // loop_footer_branch
    %10 = sbr.rel target = $region3
  $region8: #{up_forward.4} parent=0 // loop_exit
    _

// kernel: up_forward.3
$region0: #{up_forward.3}
  #allocation0 [shape = 'u32[]', space=smem, size = 0x4, offset = 0x4, fixed_abs, tag = 'smem constant byte address 0x4 - core index']
  #allocation1 [shape = 'u32[144,128]{1,0:T(1,128)}', space=vmem, size = 0x12000, scoped, tag = 'internal scratch']
  %s0 = inlined_call_operand.vmem [shape: f32[2,32,128], index: 0, kind: input, shape index: {}]
  %s1 = inlined_call_operand.vmem [shape: f32[2,32,128], index: 1, kind: input, shape index: {}]
  %s2 = inlined_call_operand.vmem [shape: f32[3,136,128], index: 2, kind: input, shape index: {}]
  %s3 = inlined_call_operand.vmem [shape: f32[3,136,128], index: 3, kind: input, shape index: {}]
  %s4 = inlined_call_operand.hbm [shape: f32[2,32,128], index: 4, kind: output, shape index: {0}]
  %s5 = inlined_call_operand.vmem [shape: f32[2,2,128], index: 5, kind: output, shape index: {1}]
  %6 = xla_tuple %s4, %s5
  %s7 = sld [smem:[#allocation0]]
  $region57: #{up_forward.3} parent=0
    _
  %s9 = ssub.s32 1, %s7
  %s10 = scalar_select 0, %s9, %s7
  $region1: #{up_forward.3} parent=0
    #allocation2 [shape = 'u8[32768]{0}', space=vmem, size = 0x8000, scoped, tag = 'output window, operand 0']
    #allocation3 [shape = 's32[2]{0}', space=sflag, size = 0x8, scoped, tag = 'scoped memory for up_forward.3']
    %11 = vsyncpa [#allocation3], 0
    %s12 = scalar_lea.sflag [#allocation3], 1
    %13 = vsyncpa %s12, 0
    loop: start=0, step=1, limit=4
    $region2: #{up_forward.3} parent=1 // loop_pre_header
      _
    $region3: #{up_forward.3} parent=1 // loop_header
      %s15 = sphi 0, %s19
      %p16 = scmp.ge.s32.totalorder %s15, 4
      %s25 = sphi 0, %s27
      %s28 = sphi 0, %s25
      %s29 = sphi 0, %s28
      %s45 = sphi 0, %s29
      %s51 = sphi 0, %s53
      %s54 = sphi 0, %s51
      %s55 = sphi 0, %s54
      %s71 = sphi 0, %s55
      %s75 = sphi 0, %s75
      %s77 = sphi 0, %s75
      %s78 = sphi 0, %s77
      %s92 = sphi 0, %s78
      %s96 = sphi 0, %s96
      %s98 = sphi 0, %s96
      %s99 = sphi 0, %s98
      %s113 = sphi 0, %s99
      %s119 = sphi 0, %s121
      %s122 = sphi 0, %s119
      %s123 = sphi 0, %s122
      %s139 = sphi 0, %s123
      %s145 = sphi 0, %s147
      %s148 = sphi 0, %s145
      %s149 = sphi 0, %s148
      %s165 = sphi 0, %s149
    $region4: #{up_forward.3} parent=1 // loop_header_branch
      %18 = sbr.rel (%p16) target = $region8
    $region5: #{up_forward.3} parent=1 // loop_body
      %s20 = ssub.s32 %s15, 1
      %s21 = ssub.s32 %s15, 2
      %s22 = sadd.s32 %s15, 1
      %s23 = ssub.s32 %s15, %s22
      %p24 = scmp.eq.s32.totalorder %s23, 0
      %s26 = sadd.s32 %s25, 1
      %s27 = scalar_select %p24, %s25, %s26
      %p30 = pneg %p24
      %p31 = scmp.eq.s32.totalorder %s15, 1
      %p32 = por %p30, %p31
      %p33 = scmp.ne.s32.totalorder %s25, %s28
      %p34 = scmp.eq.s32.totalorder %s15, 0
      %p35 = por %p33, %p34
      %p36 = scmp.ne.s32.totalorder %s25, %s28
      %p37 = scmp.eq.s32.totalorder %s20, 1
      %p38 = por %p36, %p37
      %p39 = scmp.ne.s32.totalorder %s28, %s29
      %p40 = scmp.eq.s32.totalorder %s20, 0
      %p41 = por %p39, %p40
      %p42 = scmp.ne.s32.totalorder %s28, %s29
      %p43 = scmp.eq.s32.totalorder %s21, 1
      %p44 = por %p42, %p43
      %p46 = scmp.ne.s32.totalorder %s29, %s45
      %p47 = scmp.eq.s32.totalorder %s21, 0
      %p48 = por %p46, %p47
      %s49 = ssub.s32 %s15, %s22
      %p50 = scmp.eq.s32.totalorder %s49, 0
      %s52 = sadd.s32 %s51, 1
      %s53 = scalar_select %p50, %s51, %s52
      %p56 = pneg %p50
      %p57 = scmp.eq.s32.totalorder %s15, 1
      %p58 = por %p56, %p57
      %p59 = scmp.ne.s32.totalorder %s51, %s54
      %p60 = scmp.eq.s32.totalorder %s15, 0
      %p61 = por %p59, %p60
      %p62 = scmp.ne.s32.totalorder %s51, %s54
      %p63 = scmp.eq.s32.totalorder %s20, 1
      %p64 = por %p62, %p63
      %p65 = scmp.ne.s32.totalorder %s54, %s55
      %p66 = scmp.eq.s32.totalorder %s20, 0
      %p67 = por %p65, %p66
      %p68 = scmp.ne.s32.totalorder %s54, %s55
      %p69 = scmp.eq.s32.totalorder %s21, 1
      %p70 = por %p68, %p69
      %p72 = scmp.ne.s32.totalorder %s55, %s71
      %p73 = scmp.eq.s32.totalorder %s21, 0
      %p74 = por %p72, %p73
      %s76 = sadd.s32 %s75, 1
      %p79 = scmp.eq.s32.totalorder %s15, 1
      %p80 = scmp.ne.s32.totalorder %s75, %s77
      %p81 = scmp.eq.s32.totalorder %s15, 0
      %p82 = por %p80, %p81
      %p83 = scmp.ne.s32.totalorder %s75, %s77
      %p84 = scmp.eq.s32.totalorder %s20, 1
      %p85 = por %p83, %p84
      %p86 = scmp.ne.s32.totalorder %s77, %s78
      %p87 = scmp.eq.s32.totalorder %s20, 0
      %p88 = por %p86, %p87
      %p89 = scmp.ne.s32.totalorder %s77, %s78
      %p90 = scmp.eq.s32.totalorder %s21, 1
      %p91 = por %p89, %p90
      %p93 = scmp.ne.s32.totalorder %s78, %s92
      %p94 = scmp.eq.s32.totalorder %s21, 0
      %p95 = por %p93, %p94
      %s97 = sadd.s32 %s96, 1
      %p100 = scmp.eq.s32.totalorder %s15, 1
      %p101 = scmp.ne.s32.totalorder %s96, %s98
      %p102 = scmp.eq.s32.totalorder %s15, 0
      %p103 = por %p101, %p102
      %p104 = scmp.ne.s32.totalorder %s96, %s98
      %p105 = scmp.eq.s32.totalorder %s20, 1
      %p106 = por %p104, %p105
      %p107 = scmp.ne.s32.totalorder %s98, %s99
      %p108 = scmp.eq.s32.totalorder %s20, 0
      %p109 = por %p107, %p108
      %p110 = scmp.ne.s32.totalorder %s98, %s99
      %p111 = scmp.eq.s32.totalorder %s21, 1
      %p112 = por %p110, %p111
      %p114 = scmp.ne.s32.totalorder %s99, %s113
      %p115 = scmp.eq.s32.totalorder %s21, 0
      %p116 = por %p114, %p115
      %s117 = ssub.s32 %s15, %s22
      %p118 = scmp.eq.s32.totalorder %s117, 0
      %s120 = sadd.s32 %s119, 1
      %s121 = scalar_select %p118, %s119, %s120
      %p124 = pneg %p118
      %p125 = scmp.eq.s32.totalorder %s15, 1
      %p126 = por %p124, %p125
      %p127 = scmp.ne.s32.totalorder %s119, %s122
      %p128 = scmp.eq.s32.totalorder %s15, 0
      %p129 = por %p127, %p128
      %p130 = scmp.ne.s32.totalorder %s119, %s122
      %p131 = scmp.eq.s32.totalorder %s20, 1
      %p132 = por %p130, %p131
      %p133 = scmp.ne.s32.totalorder %s122, %s123
      %p134 = scmp.eq.s32.totalorder %s20, 0
      %p135 = por %p133, %p134
      %p136 = scmp.ne.s32.totalorder %s122, %s123
      %p137 = scmp.eq.s32.totalorder %s21, 1
      %p138 = por %p136, %p137
      %p140 = scmp.ne.s32.totalorder %s123, %s139
      %p141 = scmp.eq.s32.totalorder %s21, 0
      %p142 = por %p140, %p141
      %s143 = ssub.s32 %s15, %s22
      %p144 = scmp.eq.s32.totalorder %s143, 0
      %s146 = sadd.s32 %s145, 1
      %s147 = scalar_select %p144, %s145, %s146
      %p150 = pneg %p144
      %p151 = scmp.eq.s32.totalorder %s15, 1
      %p152 = por %p150, %p151
      %p153 = scmp.ne.s32.totalorder %s145, %s148
      %p154 = scmp.eq.s32.totalorder %s15, 0
      %p155 = por %p153, %p154
      %p156 = scmp.ne.s32.totalorder %s145, %s148
      %p157 = scmp.eq.s32.totalorder %s20, 1
      %p158 = por %p156, %p157
      %p159 = scmp.ne.s32.totalorder %s148, %s149
      %p160 = scmp.eq.s32.totalorder %s20, 0
      %p161 = por %p159, %p160
      %p162 = scmp.ne.s32.totalorder %s148, %s149
      %p163 = scmp.eq.s32.totalorder %s21, 1
      %p164 = por %p162, %p163
      %p166 = scmp.ne.s32.totalorder %s149, %s165
      %p167 = scmp.eq.s32.totalorder %s21, 0
      %p168 = por %p166, %p167
      %p169 = scmp.le.s32.totalorder 1, %s15
      %p170 = scmp.lt.s32.totalorder %s15, 3
      %p171 = pnand %p169, %p170
      %p172 = pneg %p171
      // Predicated region
      $region9: #{up_forward.3} parent=5 // pred_check
        _
      $region10: #{up_forward.3} parent=5 // pred_check_branch
        %174 = sbr.rel (%p171) target = $region12
      $region11: #{up_forward.3} parent=5 // pred_region
        %s175 = ssub.s32 %s15, 1
        // Predicated region
        $region13: #{up_forward.3} parent=11 // pred_check
          %p176 = pneg %p88
        $region14: #{up_forward.3} parent=11 // pred_check_branch
          %178 = sbr.rel (%p176) target = $region16
        $region15: #{up_forward.3} parent=11 // pred_region
          _
        $region16: #{up_forward.3} parent=11 // pred_fallthru
          _
        // Predicated region
        $region17: #{up_forward.3} parent=11 // pred_check
          %p179 = pneg %p109
        $region18: #{up_forward.3} parent=11 // pred_check_branch
          %181 = sbr.rel (%p179) target = $region20
        $region19: #{up_forward.3} parent=11 // pred_region
          _
        $region20: #{up_forward.3} parent=11 // pred_fallthru
          _
      $region12: #{up_forward.3} parent=5 // pred_fallthru
        _
      %p182 = scmp.lt.s32.totalorder %s15, 2
      // Predicated region
      $region21: #{up_forward.3} parent=5 // pred_check
        %p183 = pneg %p182
      $region22: #{up_forward.3} parent=5 // pred_check_branch
        %185 = sbr.rel (%p183) target = $region24
      $region23: #{up_forward.3} parent=5 // pred_region
        // Predicated region
        $region25: #{up_forward.3} parent=23 // pred_check
          %p186 = pneg %p35
        $region26: #{up_forward.3} parent=23 // pred_check_branch
          %188 = sbr.rel (%p186) target = $region28
        $region27: #{up_forward.3} parent=23 // pred_region
          %p189 = scmp.lt.s32.totalorder %s15, 1
          %s190 = scalar_select %p189, %s15, 1
          %s191 = smul.addr %s190, 4
          %s192 = smul.addr %s191, 8
          %s193 = scalar_lea.vmem %s0, %s192
        $region28: #{up_forward.3} parent=23 // pred_fallthru
          _
        // Predicated region
        $region29: #{up_forward.3} parent=23 // pred_check
          %p194 = pneg %p61
        $region30: #{up_forward.3} parent=23 // pred_check_branch
          %196 = sbr.rel (%p194) target = $region32
        $region31: #{up_forward.3} parent=23 // pred_region
          %p197 = scmp.lt.s32.totalorder %s15, 1
          %s198 = scalar_select %p197, %s15, 1
          %s199 = smul.addr %s198, 4
          %s200 = smul.addr %s199, 8
          %s201 = scalar_lea.vmem %s1, %s200
        $region32: #{up_forward.3} parent=23 // pred_fallthru
          _
      $region24: #{up_forward.3} parent=5 // pred_fallthru
        _
      %p202 = scmp.le.s32.totalorder 1, %s15
      %p203 = scmp.lt.s32.totalorder %s15, 3
      %p204 = pnand %p202, %p203
      %p205 = pneg %p204
      // Predicated region
      $region33: #{up_forward.3} parent=5 // pred_check
        _
      $region34: #{up_forward.3} parent=5 // pred_check_branch
        %207 = sbr.rel (%p204) target = $region36
      $region35: #{up_forward.3} parent=5 // pred_region
        %s208 = ssub.s32 %s15, 1
        %p209 = scmp.lt.s32.totalorder %s20, 1
        %s210 = scalar_select %p209, %s20, 1
        %s211 = smul.addr %s210, 4
        %s212 = smul.addr %s211, 8
        %s213 = scalar_lea.vmem %s0, %s212
        %p214 = pneg %p41
        %p215 = pneg %p38
        %p216 = scmp.lt.s32.totalorder %s20, 1
        %s217 = scalar_select %p216, %s20, 1
        %s218 = smul.addr %s217, 4
        %s219 = smul.addr %s218, 8
        %s220 = scalar_lea.vmem %s1, %s219
        %p221 = pneg %p67
        %p222 = pneg %p64
        %p223 = pneg %p88
        %p224 = pneg %p85
        %p225 = pneg %p109
        %p226 = pneg %p106
        %p227 = pneg %p135
        %p228 = pneg %p132
        %s229 = sand.u32 %s122, 1
        %s230 = scalar_lea.sflag [#allocation3], %s229
        %s231 = sand.u32 %s122, 1
        %s232 = smul.addr %s231, 32
        %s233 = scalar_lea.vmem [#allocation2], %s232
        %p234 = pneg %p161
        %p235 = pneg %p158
        %p236 = scmp.lt.s32.totalorder %s20, 1
        %s237 = scalar_select %p236, %s20, 1
        %s238 = smul.addr %s237, 2
        %s239 = scalar_lea.vmem %s5, %s238
        %p240 = scmp.lt.s32.totalorder %s20, 1
        %s241 = scalar_select %p240, %s20, 1
        %s242 = smul.addr %s241, 4
        %s243 = smul.addr %s242, 8
        %s244 = scalar_lea.vmem %s0, %s243
        %p245 = scmp.lt.s32.totalorder %s20, 1
        %s246 = scalar_select %p245, %s20, 1
        %s247 = smul.addr %s246, 4
        %s248 = smul.addr %s247, 8
        %s249 = scalar_lea.vmem %s1, %s248
        %p250 = scmp.lt.s32.totalorder %s20, 1
        %s251 = scalar_select %p250, %s20, 1
        %s252 = smul.addr %s251, 2
        %s253 = scalar_lea.vmem %s5, %s252
        %v254 = vld [vmem:[%s244] sm:$0xff]
        %v255 = vld [vmem:[%s244 + $0x8] sm:$0xff]
        %v256 = vld [vmem:[%s244 + $0x10] sm:$0xff]
        %v257 = vld [vmem:[%s244 + $0x18] sm:$0xff]
        %262 = vrot.lane.b32.xlu0 %v254, 4
        %v263 = vpop.permute.xlu0 %262
        %264 = vrot.lane.b32.xlu0 %v255, 4
        %v265 = vpop.permute.xlu0 %264
        %266 = vrot.lane.b32.xlu0 %v256, 4
        %v267 = vpop.permute.xlu0 %266
        %268 = vrot.lane.b32.xlu0 %v257, 4
        %v269 = vpop.permute.xlu0 %268
        %vm274 = vcmask 31744
        %v275 = vsel %vm274, 0.0, %v263
        %v276 = vsel %vm274, 0.0, %v265
        %v277 = vsel %vm274, 0.0, %v267
        %v278 = vsel %vm274, 0.0, %v269
        %v279 = vsel %vm274, %v263, 0.0
        %v280 = vsel %vm274, %v265, 0.0
        %v281 = vsel %vm274, %v267, 0.0
        %v282 = vsel %vm274, %v269, 0.0
        %vm291 = vcmask 1040384
        %v292 = vrot.slane %v275, 7
        %v293 = vrot.slane %v279, 7
        %v294 = vrot.slane %v276, 7
        %v295 = vsel %vm291, %v292, %v294
        %v296 = vrot.slane %v280, 7
        %v297 = vsel %vm291, %v293, %v296
        %v298 = vrot.slane %v277, 7
        %v299 = vsel %vm291, %v294, %v298
        %v300 = vrot.slane %v281, 7
        %v301 = vsel %vm291, %v296, %v300
        %v302 = vrot.slane %v278, 7
        %v303 = vsel %vm291, %v298, %v302
        %v304 = vrot.slane %v282, 7
        %v305 = vsel %vm291, %v300, %v304
        %v313 = vsel %vm291, 0.0, %v292
        %v314 = vsel %vm291, 0.0, %v293
        %v315 = vsel %vm291, %v302, 0.0
        %v316 = vsel %vm291, %v304, 0.0
        %v317 = vld [vmem:[%s2] sm:$0xff]
        %v318 = vld [vmem:[%s2 + $0x8] sm:$0xff]
        %v319 = vld [vmem:[%s2 + $0x10] sm:$0xff]
        %v320 = vld [vmem:[%s2 + $0x18] sm:$0xff]
        %v321 = vld [vmem:[%s2 + $0x20] sm:$0xff]
        %v322 = vld [vmem:[%s2 + $0x28] sm:$0xff]
        %v323 = vld [vmem:[%s2 + $0x30] sm:$0xff]
        %v324 = vld [vmem:[%s2 + $0x38] sm:$0xff]
        %v325 = vld [vmem:[%s2 + $0x40] sm:$0xff]
        %v326 = vld [vmem:[%s2 + $0x48] sm:$0xff]
        %v327 = vld [vmem:[%s2 + $0x50] sm:$0xff]
        %v328 = vld [vmem:[%s2 + $0x58] sm:$0xff]
        %v329 = vld [vmem:[%s2 + $0x60] sm:$0xff]
        %v330 = vld [vmem:[%s2 + $0x68] sm:$0xff]
        %v331 = vld [vmem:[%s2 + $0x70] sm:$0xff]
        %v332 = vld [vmem:[%s2 + $0x78] sm:$0xff]
        %v333 = vld [vmem:[%s2 + $0x80] sm:$0xff]
        %s334 = scalar_lea.vmem %s2, 136
        %v335 = vld [vmem:[%s334] sm:$0xff]
        %v336 = vld [vmem:[%s334 + $0x8] sm:$0xff]
        %v337 = vld [vmem:[%s334 + $0x10] sm:$0xff]
        %v338 = vld [vmem:[%s334 + $0x18] sm:$0xff]
        %v339 = vld [vmem:[%s334 + $0x20] sm:$0xff]
        %v340 = vld [vmem:[%s334 + $0x28] sm:$0xff]
        %v341 = vld [vmem:[%s334 + $0x30] sm:$0xff]
        %v342 = vld [vmem:[%s334 + $0x38] sm:$0xff]
        %v343 = vld [vmem:[%s334 + $0x40] sm:$0xff]
        %v344 = vld [vmem:[%s334 + $0x48] sm:$0xff]
        %v345 = vld [vmem:[%s334 + $0x50] sm:$0xff]
        %v346 = vld [vmem:[%s334 + $0x58] sm:$0xff]
        %v347 = vld [vmem:[%s334 + $0x60] sm:$0xff]
        %v348 = vld [vmem:[%s334 + $0x68] sm:$0xff]
        %v349 = vld [vmem:[%s334 + $0x70] sm:$0xff]
        %v350 = vld [vmem:[%s334 + $0x78] sm:$0xff]
        %v351 = vld [vmem:[%s334 + $0x80] sm:$0xff]
        %vm356 = vcmask 1046528
        %v357 = vrot.slane %v313, 1
        %v358 = vrot.slane %v295, 1
        %v359 = vsel %vm356, %v357, %v358
        %v360 = vrot.slane %v314, 1
        %v361 = vrot.slane %v297, 1
        %v362 = vsel %vm356, %v360, %v361
        %v363 = vrot.slane %v299, 1
        %v364 = vsel %vm356, %v358, %v363
        %v365 = vrot.slane %v301, 1
        %v366 = vsel %vm356, %v361, %v365
        %v367 = vrot.slane %v303, 1
        %v368 = vsel %vm356, %v363, %v367
        %v369 = vrot.slane %v305, 1
        %v370 = vsel %vm356, %v365, %v369
        %v371 = vrot.slane %v315, 1
        %v372 = vsel %vm356, %v367, %v371
        %v373 = vrot.slane %v316, 1
        %v374 = vsel %vm356, %v369, %v373
        %vm379 = vcmask 64512
        %v380 = vsel %vm379, %v362, 0
        %v382 = vsel %vm379, %v366, 0
        %v384 = vsel %vm379, %v370, 0
        %v386 = vsel %vm379, %v374, 0
        %388 = vmatprep.subr.mxu0 0.0
        %389 = vmatpush1.msra.mxu0 %v350
        %390 = vmatprep.subr.mxu0 0.0
        %391 = vmatpush1.msra.mxu0 %v349
        %392 = vmatprep.subr.mxu0 0.0
        %393 = vmatpush1.msra.mxu0 %v348
        %394 = vmatprep.subr.mxu0 0.0
        %395 = vmatpush1.msra.mxu0 %v347
        %396 = vmatprep.subr.mxu0 0.0
        %397 = vmatpush1.msra.mxu0 %v346
        %398 = vmatprep.subr.mxu0 0.0
        %399 = vmatpush1.msra.mxu0 %v345
        %400 = vmatprep.subr.mxu0 0.0
        %401 = vmatpush1.msra.mxu0 %v344
        %402 = vmatprep.subr.mxu0 0.0
        %403 = vmatpush1.msra.mxu0 %v343
        %404 = vmatprep.subr.mxu0 0.0
        %405 = vmatpush1.msra.mxu0 %v342
        %406 = vmatprep.subr.mxu0 0.0
        %407 = vmatpush1.msra.mxu0 %v341
        %408 = vmatprep.subr.mxu0 0.0
        %409 = vmatpush1.msra.mxu0 %v340
        %410 = vmatprep.subr.mxu0 0.0
        %411 = vmatpush1.msra.mxu0 %v339
        %412 = vmatprep.subr.mxu0 0.0
        %413 = vmatpush1.msra.mxu0 %v338
        %414 = vmatprep.subr.mxu0 0.0
        %415 = vmatpush1.msra.mxu0 %v337
        %416 = vmatprep.subr.mxu0 0.0
        %417 = vmatpush1.msra.mxu0 %v336
        %418 = vmatprep.subr.mxu0 0.0
        %419 = vmatpush1.msra.mxu0 %v335
        %420 = vmatprep.subr.mxu0 0.0
        %421 = vmatpush2.msra.mxu0 0.0
        %422 = vmatprep.subr.mxu0 0.0
        %423 = vmatpush2.msra.mxu0 0.0
        %424 = vmatprep.subr.mxu0 0.0
        %425 = vmatpush2.msra.mxu0 0.0
        %426 = vmatprep.subr.mxu0 0.0
        %427 = vmatpush2.msra.mxu0 0.0
        %428 = vmatprep.subr.mxu0 0.0
        %429 = vmatpush2.msra.mxu0 0.0
        %430 = vmatprep.subr.mxu0 0.0
        %431 = vmatpush2.msra.mxu0 0.0
        %432 = vmatprep.subr.mxu0 0.0
        %433 = vmatpush2.msra.mxu0 0.0
        %434 = vmatprep.subr.mxu0 0.0
        %435 = vmatpush2.msra.mxu0 0.0
        %436 = vmatprep.subr.mxu0 0.0
        %437 = vmatpush2.msra.mxu0 0.0
        %438 = vmatprep.subr.mxu0 0.0
        %439 = vmatpush2.msra.mxu0 0.0
        %440 = vmatprep.subr.mxu0 0.0
        %441 = vmatpush2.msra.mxu0 0.0
        %442 = vmatprep.subr.mxu0 0.0
        %443 = vmatpush2.msra.mxu0 0.0
        %444 = vmatprep.subr.mxu0 0.0
        %445 = vmatpush2.msra.mxu0 0.0
        %446 = vmatprep.subr.mxu0 0.0
        %447 = vmatpush2.msra.mxu0 0.0
        %448 = vmatprep.subr.mxu0 0.0
        %449 = vmatpush2.msra.mxu0 0.0
        %450 = vmatprep.subr.mxu0 0.0
        %451 = vmatpush2.msra.mxu0 %v351
        %452 = vmatprep.mubr.f32.mxu0 %v380
        %453 = vmatmul.mubr.f32.gmra.mxu0 %v359
        %v454 = vpop.f32.mrf.mxu0
        %v455 = vadd.f32 0.0, %v454
        %v456 = vpop.f32.mrf.mxu0
        %457 = vmatprep.mubr.f32.mxu0 %v382
        %458 = vmatmul.mubr.f32.gmra.mxu0 %v364
        %v459 = vpop.f32.mrf.mxu0
        %v460 = vadd.f32 0.0, %v459
        %v461 = vpop.f32.mrf.mxu0
        %462 = vmatprep.mubr.f32.mxu0 %v384
        %463 = vmatmul.mubr.f32.gmra.mxu0 %v368
        %v464 = vpop.f32.mrf.mxu0
        %v465 = vadd.f32 0.0, %v464
        %v466 = vpop.f32.mrf.mxu0
        %467 = vmatprep.mubr.f32.mxu0 %v386
        %468 = vmatmul.mubr.f32.gmra.mxu0 %v372
        %v469 = vpop.f32.mrf.mxu0
        %v470 = vadd.f32 0.0, %v469
        %v471 = vpop.f32.mrf.mxu0
        %472 = vdwg.mxu0
        %v473 = vsel %vm379, %v314, 0
        %v475 = vsel %vm379, %v297, 0
        %v477 = vsel %vm379, %v301, 0
        %v479 = vsel %vm379, %v305, 0
        %481 = vmatprep.subr.mxu0 0.0
        %482 = vmatpush1.msra.mxu0 %v332
        %483 = vmatprep.subr.mxu0 0.0
        %484 = vmatpush1.msra.mxu0 %v331
        %485 = vmatprep.subr.mxu0 0.0
        %486 = vmatpush1.msra.mxu0 %v330
        %487 = vmatprep.subr.mxu0 0.0
        %488 = vmatpush1.msra.mxu0 %v329
        %489 = vmatprep.subr.mxu0 0.0
        %490 = vmatpush1.msra.mxu0 %v328
        %491 = vmatprep.subr.mxu0 0.0
        %492 = vmatpush1.msra.mxu0 %v327
        %493 = vmatprep.subr.mxu0 0.0
        %494 = vmatpush1.msra.mxu0 %v326
        %495 = vmatprep.subr.mxu0 0.0
        %496 = vmatpush1.msra.mxu0 %v325
        %497 = vmatprep.subr.mxu0 0.0
        %498 = vmatpush1.msra.mxu0 %v324
        %499 = vmatprep.subr.mxu0 0.0
        %500 = vmatpush1.msra.mxu0 %v323
        %501 = vmatprep.subr.mxu0 0.0
        %502 = vmatpush1.msra.mxu0 %v322
        %503 = vmatprep.subr.mxu0 0.0
        %504 = vmatpush1.msra.mxu0 %v321
        %505 = vmatprep.subr.mxu0 0.0
        %506 = vmatpush1.msra.mxu0 %v320
        %507 = vmatprep.subr.mxu0 0.0
        %508 = vmatpush1.msra.mxu0 %v319
        %509 = vmatprep.subr.mxu0 0.0
        %510 = vmatpush1.msra.mxu0 %v318
        %511 = vmatprep.subr.mxu0 0.0
        %512 = vmatpush1.msra.mxu0 %v317
        %513 = vmatprep.subr.mxu0 0.0
        %514 = vmatpush2.msra.mxu0 0.0
        %515 = vmatprep.subr.mxu0 0.0
        %516 = vmatpush2.msra.mxu0 0.0
        %517 = vmatprep.subr.mxu0 0.0
        %518 = vmatpush2.msra.mxu0 0.0
        %519 = vmatprep.subr.mxu0 0.0
        %520 = vmatpush2.msra.mxu0 0.0
        %521 = vmatprep.subr.mxu0 0.0
        %522 = vmatpush2.msra.mxu0 0.0
        %523 = vmatprep.subr.mxu0 0.0
        %524 = vmatpush2.msra.mxu0 0.0
        %525 = vmatprep.subr.mxu0 0.0
        %526 = vmatpush2.msra.mxu0 0.0
        %527 = vmatprep.subr.mxu0 0.0
        %528 = vmatpush2.msra.mxu0 0.0
        %529 = vmatprep.subr.mxu0 0.0
        %530 = vmatpush2.msra.mxu0 0.0
        %531 = vmatprep.subr.mxu0 0.0
        %532 = vmatpush2.msra.mxu0 0.0
        %533 = vmatprep.subr.mxu0 0.0
        %534 = vmatpush2.msra.mxu0 0.0
        %535 = vmatprep.subr.mxu0 0.0
        %536 = vmatpush2.msra.mxu0 0.0
        %537 = vmatprep.subr.mxu0 0.0
        %538 = vmatpush2.msra.mxu0 0.0
        %539 = vmatprep.subr.mxu0 0.0
        %540 = vmatpush2.msra.mxu0 0.0
        %541 = vmatprep.subr.mxu0 0.0
        %542 = vmatpush2.msra.mxu0 0.0
        %543 = vmatprep.subr.mxu0 0.0
        %544 = vmatpush2.msra.mxu0 %v333
        %545 = vmatprep.mubr.f32.mxu0 %v473
        %546 = vmatmul.mubr.f32.gmra.mxu0 %v313
        %v547 = vpop.f32.mrf.mxu0
        %v548 = vadd.f32 %v455, %v547
        %v549 = vpop.f32.mrf.mxu0
        %550 = vmatprep.mubr.f32.mxu0 %v475
        %551 = vmatmul.mubr.f32.gmra.mxu0 %v295
        %v552 = vpop.f32.mrf.mxu0
        %v553 = vadd.f32 %v460, %v552
        %v554 = vpop.f32.mrf.mxu0
        %555 = vmatprep.mubr.f32.mxu0 %v477
        %556 = vmatmul.mubr.f32.gmra.mxu0 %v299
        %v557 = vpop.f32.mrf.mxu0
        %v558 = vadd.f32 %v465, %v557
        %v559 = vpop.f32.mrf.mxu0
        %560 = vmatprep.mubr.f32.mxu0 %v479
        %561 = vmatmul.mubr.f32.gmra.mxu0 %v303
        %v562 = vpop.f32.mrf.mxu0
        %v563 = vadd.f32 %v470, %v562
        %v564 = vpop.f32.mrf.mxu0
        %565 = vdwg.mxu0
        %s566 = scalar_lea.vmem %s2, 272
        %v567 = vld [vmem:[%s566] sm:$0xff]
        %v568 = vld [vmem:[%s566 + $0x8] sm:$0xff]
        %v569 = vld [vmem:[%s566 + $0x10] sm:$0xff]
        %v570 = vld [vmem:[%s566 + $0x18] sm:$0xff]
        %v571 = vld [vmem:[%s566 + $0x20] sm:$0xff]
        %v572 = vld [vmem:[%s566 + $0x28] sm:$0xff]
        %v573 = vld [vmem:[%s566 + $0x30] sm:$0xff]
        %v574 = vld [vmem:[%s566 + $0x38] sm:$0xff]
        %v575 = vld [vmem:[%s566 + $0x40] sm:$0xff]
        %v576 = vld [vmem:[%s566 + $0x48] sm:$0xff]
        %v577 = vld [vmem:[%s566 + $0x50] sm:$0xff]
        %v578 = vld [vmem:[%s566 + $0x58] sm:$0xff]
        %v579 = vld [vmem:[%s566 + $0x60] sm:$0xff]
        %v580 = vld [vmem:[%s566 + $0x68] sm:$0xff]
        %v581 = vld [vmem:[%s566 + $0x70] sm:$0xff]
        %v582 = vld [vmem:[%s566 + $0x78] sm:$0xff]
        %v583 = vld [vmem:[%s566 + $0x80] sm:$0xff]
        %vm584 = vcmask 1045504
        %v585 = vrot.slane %v313, 2
        %v586 = vrot.slane %v295, 2
        %v587 = vsel %vm584, %v585, %v586
        %v588 = vrot.slane %v314, 2
        %v589 = vrot.slane %v297, 2
        %v590 = vsel %vm584, %v588, %v589
        %v591 = vrot.slane %v299, 2
        %v592 = vsel %vm584, %v586, %v591
        %v593 = vrot.slane %v301, 2
        %v594 = vsel %vm584, %v589, %v593
        %v595 = vrot.slane %v303, 2
        %v596 = vsel %vm584, %v591, %v595
        %v597 = vrot.slane %v305, 2
        %v598 = vsel %vm584, %v593, %v597
        %v599 = vrot.slane %v315, 2
        %v600 = vsel %vm584, %v595, %v599
        %v601 = vrot.slane %v316, 2
        %v602 = vsel %vm584, %v597, %v601
        %v607 = vsel %vm379, %v590, 0
        %v609 = vsel %vm379, %v594, 0
        %v611 = vsel %vm379, %v598, 0
        %v613 = vsel %vm379, %v602, 0
        %615 = vmatprep.subr.mxu0 0.0
        %616 = vmatpush1.msra.mxu0 %v582
        %617 = vmatprep.subr.mxu0 0.0
        %618 = vmatpush1.msra.mxu0 %v581
        %619 = vmatprep.subr.mxu0 0.0
        %620 = vmatpush1.msra.mxu0 %v580
        %621 = vmatprep.subr.mxu0 0.0
        %622 = vmatpush1.msra.mxu0 %v579
        %623 = vmatprep.subr.mxu0 0.0
        %624 = vmatpush1.msra.mxu0 %v578
        %625 = vmatprep.subr.mxu0 0.0
        %626 = vmatpush1.msra.mxu0 %v577
        %627 = vmatprep.subr.mxu0 0.0
        %628 = vmatpush1.msra.mxu0 %v576
        %629 = vmatprep.subr.mxu0 0.0
        %630 = vmatpush1.msra.mxu0 %v575
        %631 = vmatprep.subr.mxu0 0.0
        %632 = vmatpush1.msra.mxu0 %v574
        %633 = vmatprep.subr.mxu0 0.0
        %634 = vmatpush1.msra.mxu0 %v573
        %635 = vmatprep.subr.mxu0 0.0
        %636 = vmatpush1.msra.mxu0 %v572
        %637 = vmatprep.subr.mxu0 0.0
        %638 = vmatpush1.msra.mxu0 %v571
        %639 = vmatprep.subr.mxu0 0.0
        %640 = vmatpush1.msra.mxu0 %v570
        %641 = vmatprep.subr.mxu0 0.0
        %642 = vmatpush1.msra.mxu0 %v569
        %643 = vmatprep.subr.mxu0 0.0
        %644 = vmatpush1.msra.mxu0 %v568
        %645 = vmatprep.subr.mxu0 0.0
        %646 = vmatpush1.msra.mxu0 %v567
        %647 = vmatprep.subr.mxu0 0.0
        %648 = vmatpush2.msra.mxu0 0.0
        %649 = vmatprep.subr.mxu0 0.0
        %650 = vmatpush2.msra.mxu0 0.0
        %651 = vmatprep.subr.mxu0 0.0
        %652 = vmatpush2.msra.mxu0 0.0
        %653 = vmatprep.subr.mxu0 0.0
        %654 = vmatpush2.msra.mxu0 0.0
        %655 = vmatprep.subr.mxu0 0.0
        %656 = vmatpush2.msra.mxu0 0.0
        %657 = vmatprep.subr.mxu0 0.0
        %658 = vmatpush2.msra.mxu0 0.0
        %659 = vmatprep.subr.mxu0 0.0
        %660 = vmatpush2.msra.mxu0 0.0
        %661 = vmatprep.subr.mxu0 0.0
        %662 = vmatpush2.msra.mxu0 0.0
        %663 = vmatprep.subr.mxu0 0.0
        %664 = vmatpush2.msra.mxu0 0.0
        %665 = vmatprep.subr.mxu0 0.0
        %666 = vmatpush2.msra.mxu0 0.0
        %667 = vmatprep.subr.mxu0 0.0
        %668 = vmatpush2.msra.mxu0 0.0
        %669 = vmatprep.subr.mxu0 0.0
        %670 = vmatpush2.msra.mxu0 0.0
        %671 = vmatprep.subr.mxu0 0.0
        %672 = vmatpush2.msra.mxu0 0.0
        %673 = vmatprep.subr.mxu0 0.0
        %674 = vmatpush2.msra.mxu0 0.0
        %675 = vmatprep.subr.mxu0 0.0
        %676 = vmatpush2.msra.mxu0 0.0
        %677 = vmatprep.subr.mxu0 0.0
        %678 = vmatpush2.msra.mxu0 %v583
        %679 = vmatprep.mubr.f32.mxu0 %v607
        %680 = vmatmul.mubr.f32.gmra.mxu0 %v587
        %v681 = vpop.f32.mrf.mxu0
        %v682 = vadd.f32 0.0, %v681
        %v683 = vpop.f32.mrf.mxu0
        %684 = vmatprep.mubr.f32.mxu0 %v609
        %685 = vmatmul.mubr.f32.gmra.mxu0 %v592
        %v686 = vpop.f32.mrf.mxu0
        %v687 = vadd.f32 0.0, %v686
        %v688 = vpop.f32.mrf.mxu0
        %689 = vmatprep.mubr.f32.mxu0 %v611
        %690 = vmatmul.mubr.f32.gmra.mxu0 %v596
        %v691 = vpop.f32.mrf.mxu0
        %v692 = vadd.f32 0.0, %v691
        %v693 = vpop.f32.mrf.mxu0
        %694 = vmatprep.mubr.f32.mxu0 %v613
        %695 = vmatmul.mubr.f32.gmra.mxu0 %v600
        %v696 = vpop.f32.mrf.mxu0
        %v697 = vadd.f32 0.0, %v696
        %v698 = vpop.f32.mrf.mxu0
        %699 = vdwg.mxu0
        %v700 = vadd.f32 %v548, %v682
        %v701 = vadd.f32 %v553, %v687
        %v702 = vadd.f32 %v558, %v692
        %v703 = vadd.f32 %v563, %v697
        %v704 = vld [vmem:[%s249] sm:$0xff]
        %v705 = vld [vmem:[%s249 + $0x8] sm:$0xff]
        %v706 = vld [vmem:[%s249 + $0x10] sm:$0xff]
        %v707 = vld [vmem:[%s249 + $0x18] sm:$0xff]
        %712 = vrot.lane.b32.xlu0 %v704, 4
        %v713 = vpop.permute.xlu0 %712
        %714 = vrot.lane.b32.xlu0 %v705, 4
        %v715 = vpop.permute.xlu0 %714
        %716 = vrot.lane.b32.xlu0 %v706, 4
        %v717 = vpop.permute.xlu0 %716
        %718 = vrot.lane.b32.xlu0 %v707, 4
        %v719 = vpop.permute.xlu0 %718
        %v724 = vsel %vm274, 0.0, %v713
        %v725 = vsel %vm274, 0.0, %v715
        %v726 = vsel %vm274, 0.0, %v717
        %v727 = vsel %vm274, 0.0, %v719
        %v728 = vsel %vm274, %v713, 0.0
        %v729 = vsel %vm274, %v715, 0.0
        %v730 = vsel %vm274, %v717, 0.0
        %v731 = vsel %vm274, %v719, 0.0
        %v740 = vrot.slane %v724, 7
        %v741 = vrot.slane %v728, 7
        %v742 = vrot.slane %v725, 7
        %v743 = vsel %vm291, %v740, %v742
        %v744 = vrot.slane %v729, 7
        %v745 = vsel %vm291, %v741, %v744
        %v746 = vrot.slane %v726, 7
        %v747 = vsel %vm291, %v742, %v746
        %v748 = vrot.slane %v730, 7
        %v749 = vsel %vm291, %v744, %v748
        %v750 = vrot.slane %v727, 7
        %v751 = vsel %vm291, %v746, %v750
        %v752 = vrot.slane %v731, 7
        %v753 = vsel %vm291, %v748, %v752
        %v761 = vsel %vm291, 0.0, %v740
        %v762 = vsel %vm291, 0.0, %v741
        %v763 = vsel %vm291, %v750, 0.0
        %v764 = vsel %vm291, %v752, 0.0
        %v765 = vld [vmem:[%s3] sm:$0xff]
        %v766 = vld [vmem:[%s3 + $0x8] sm:$0xff]
        %v767 = vld [vmem:[%s3 + $0x10] sm:$0xff]
        %v768 = vld [vmem:[%s3 + $0x18] sm:$0xff]
        %v769 = vld [vmem:[%s3 + $0x20] sm:$0xff]
        %v770 = vld [vmem:[%s3 + $0x28] sm:$0xff]
        %v771 = vld [vmem:[%s3 + $0x30] sm:$0xff]
        %v772 = vld [vmem:[%s3 + $0x38] sm:$0xff]
        %v773 = vld [vmem:[%s3 + $0x40] sm:$0xff]
        %v774 = vld [vmem:[%s3 + $0x48] sm:$0xff]
        %v775 = vld [vmem:[%s3 + $0x50] sm:$0xff]
        %v776 = vld [vmem:[%s3 + $0x58] sm:$0xff]
        %v777 = vld [vmem:[%s3 + $0x60] sm:$0xff]
        %v778 = vld [vmem:[%s3 + $0x68] sm:$0xff]
        %v779 = vld [vmem:[%s3 + $0x70] sm:$0xff]
        %v780 = vld [vmem:[%s3 + $0x78] sm:$0xff]
        %v781 = vld [vmem:[%s3 + $0x80] sm:$0xff]
        %v783 = vsel %vm379, %v762, 0
        %v785 = vsel %vm379, %v745, 0
        %v787 = vsel %vm379, %v749, 0
        %v789 = vsel %vm379, %v753, 0
        %791 = vmatprep.subr.mxu0 0.0
        %792 = vmatpush1.msra.mxu0 %v780
        %793 = vmatprep.subr.mxu0 0.0
        %794 = vmatpush1.msra.mxu0 %v779
        %795 = vmatprep.subr.mxu0 0.0
        %796 = vmatpush1.msra.mxu0 %v778
        %797 = vmatprep.subr.mxu0 0.0
        %798 = vmatpush1.msra.mxu0 %v777
        %799 = vmatprep.subr.mxu0 0.0
        %800 = vmatpush1.msra.mxu0 %v776
        %801 = vmatprep.subr.mxu0 0.0
        %802 = vmatpush1.msra.mxu0 %v775
        %803 = vmatprep.subr.mxu0 0.0
        %804 = vmatpush1.msra.mxu0 %v774
        %805 = vmatprep.subr.mxu0 0.0
        %806 = vmatpush1.msra.mxu0 %v773
        %807 = vmatprep.subr.mxu0 0.0
        %808 = vmatpush1.msra.mxu0 %v772
        %809 = vmatprep.subr.mxu0 0.0
        %810 = vmatpush1.msra.mxu0 %v771
        %811 = vmatprep.subr.mxu0 0.0
        %812 = vmatpush1.msra.mxu0 %v770
        %813 = vmatprep.subr.mxu0 0.0
        %814 = vmatpush1.msra.mxu0 %v769
        %815 = vmatprep.subr.mxu0 0.0
        %816 = vmatpush1.msra.mxu0 %v768
        %817 = vmatprep.subr.mxu0 0.0
        %818 = vmatpush1.msra.mxu0 %v767
        %819 = vmatprep.subr.mxu0 0.0
        %820 = vmatpush1.msra.mxu0 %v766
        %821 = vmatprep.subr.mxu0 0.0
        %822 = vmatpush1.msra.mxu0 %v765
        %823 = vmatprep.subr.mxu0 0.0
        %824 = vmatpush2.msra.mxu0 0.0
        %825 = vmatprep.subr.mxu0 0.0
        %826 = vmatpush2.msra.mxu0 0.0
        %827 = vmatprep.subr.mxu0 0.0
        %828 = vmatpush2.msra.mxu0 0.0
        %829 = vmatprep.subr.mxu0 0.0
        %830 = vmatpush2.msra.mxu0 0.0
        %831 = vmatprep.subr.mxu0 0.0
        %832 = vmatpush2.msra.mxu0 0.0
        %833 = vmatprep.subr.mxu0 0.0
        %834 = vmatpush2.msra.mxu0 0.0
        %835 = vmatprep.subr.mxu0 0.0
        %836 = vmatpush2.msra.mxu0 0.0
        %837 = vmatprep.subr.mxu0 0.0
        %838 = vmatpush2.msra.mxu0 0.0
        %839 = vmatprep.subr.mxu0 0.0
        %840 = vmatpush2.msra.mxu0 0.0
        %841 = vmatprep.subr.mxu0 0.0
        %842 = vmatpush2.msra.mxu0 0.0
        %843 = vmatprep.subr.mxu0 0.0
        %844 = vmatpush2.msra.mxu0 0.0
        %845 = vmatprep.subr.mxu0 0.0
        %846 = vmatpush2.msra.mxu0 0.0
        %847 = vmatprep.subr.mxu0 0.0
        %848 = vmatpush2.msra.mxu0 0.0
        %849 = vmatprep.subr.mxu0 0.0
        %850 = vmatpush2.msra.mxu0 0.0
        %851 = vmatprep.subr.mxu0 0.0
        %852 = vmatpush2.msra.mxu0 0.0
        %853 = vmatprep.subr.mxu0 0.0
        %854 = vmatpush2.msra.mxu0 %v781
        %855 = vmatprep.mubr.f32.mxu0 %v783
        %856 = vmatmul.mubr.f32.gmra.mxu0 %v761
        %v857 = vpop.f32.mrf.mxu0
        %v858 = vadd.f32 0.0, %v857
        %v859 = vpop.f32.mrf.mxu0
        %860 = vmatprep.mubr.f32.mxu0 %v785
        %861 = vmatmul.mubr.f32.gmra.mxu0 %v743
        %v862 = vpop.f32.mrf.mxu0
        %v863 = vadd.f32 0.0, %v862
        %v864 = vpop.f32.mrf.mxu0
        %865 = vmatprep.mubr.f32.mxu0 %v787
        %866 = vmatmul.mubr.f32.gmra.mxu0 %v747
        %v867 = vpop.f32.mrf.mxu0
        %v868 = vadd.f32 0.0, %v867
        %v869 = vpop.f32.mrf.mxu0
        %870 = vmatprep.mubr.f32.mxu0 %v789
        %871 = vmatmul.mubr.f32.gmra.mxu0 %v751
        %v872 = vpop.f32.mrf.mxu0
        %v873 = vadd.f32 0.0, %v872
        %v874 = vpop.f32.mrf.mxu0
        %875 = vdwg.mxu0
        %v876 = vadd.f32 %v700, %v858
        %v877 = vadd.f32 %v701, %v863
        %v878 = vadd.f32 %v702, %v868
        %v879 = vadd.f32 %v703, %v873
        %s880 = scalar_lea.vmem %s3, 136
        %v881 = vld [vmem:[%s880] sm:$0xff]
        %v882 = vld [vmem:[%s880 + $0x8] sm:$0xff]
        %v883 = vld [vmem:[%s880 + $0x10] sm:$0xff]
        %v884 = vld [vmem:[%s880 + $0x18] sm:$0xff]
        %v885 = vld [vmem:[%s880 + $0x20] sm:$0xff]
        %v886 = vld [vmem:[%s880 + $0x28] sm:$0xff]
        %v887 = vld [vmem:[%s880 + $0x30] sm:$0xff]
        %v888 = vld [vmem:[%s880 + $0x38] sm:$0xff]
        %v889 = vld [vmem:[%s880 + $0x40] sm:$0xff]
        %v890 = vld [vmem:[%s880 + $0x48] sm:$0xff]
        %v891 = vld [vmem:[%s880 + $0x50] sm:$0xff]
        %v892 = vld [vmem:[%s880 + $0x58] sm:$0xff]
        %v893 = vld [vmem:[%s880 + $0x60] sm:$0xff]
        %v894 = vld [vmem:[%s880 + $0x68] sm:$0xff]
        %v895 = vld [vmem:[%s880 + $0x70] sm:$0xff]
        %v896 = vld [vmem:[%s880 + $0x78] sm:$0xff]
        %v897 = vld [vmem:[%s880 + $0x80] sm:$0xff]
        %v901 = vrot.slane %v761, 1
        %v902 = vrot.slane %v743, 1
        %v903 = vsel %vm356, %v901, %v902
        %v904 = vrot.slane %v762, 1
        %v905 = vrot.slane %v745, 1
        %v906 = vsel %vm356, %v904, %v905
        %v907 = vrot.slane %v747, 1
        %v908 = vsel %vm356, %v902, %v907
        %v909 = vrot.slane %v749, 1
        %v910 = vsel %vm356, %v905, %v909
        %v911 = vrot.slane %v751, 1
        %v912 = vsel %vm356, %v907, %v911
        %v913 = vrot.slane %v753, 1
        %v914 = vsel %vm356, %v909, %v913
        %v915 = vrot.slane %v763, 1
        %v916 = vsel %vm356, %v911, %v915
        %v917 = vrot.slane %v764, 1
        %v918 = vsel %vm356, %v913, %v917
        %v923 = vsel %vm379, %v906, 0
        %v925 = vsel %vm379, %v910, 0
        %v927 = vsel %vm379, %v914, 0
        %v929 = vsel %vm379, %v918, 0
        %931 = vmatprep.subr.mxu0 0.0
        %932 = vmatpush1.msra.mxu0 %v896
        %933 = vmatprep.subr.mxu0 0.0
        %934 = vmatpush1.msra.mxu0 %v895
        %935 = vmatprep.subr.mxu0 0.0
        %936 = vmatpush1.msra.mxu0 %v894
        %937 = vmatprep.subr.mxu0 0.0
        %938 = vmatpush1.msra.mxu0 %v893
        %939 = vmatprep.subr.mxu0 0.0
        %940 = vmatpush1.msra.mxu0 %v892
        %941 = vmatprep.subr.mxu0 0.0
        %942 = vmatpush1.msra.mxu0 %v891
        %943 = vmatprep.subr.mxu0 0.0
        %944 = vmatpush1.msra.mxu0 %v890
        %945 = vmatprep.subr.mxu0 0.0
        %946 = vmatpush1.msra.mxu0 %v889
        %947 = vmatprep.subr.mxu0 0.0
        %948 = vmatpush1.msra.mxu0 %v888
        %949 = vmatprep.subr.mxu0 0.0
        %950 = vmatpush1.msra.mxu0 %v887
        %951 = vmatprep.subr.mxu0 0.0
        %952 = vmatpush1.msra.mxu0 %v886
        %953 = vmatprep.subr.mxu0 0.0
        %954 = vmatpush1.msra.mxu0 %v885
        %955 = vmatprep.subr.mxu0 0.0
        %956 = vmatpush1.msra.mxu0 %v884
        %957 = vmatprep.subr.mxu0 0.0
        %958 = vmatpush1.msra.mxu0 %v883
        %959 = vmatprep.subr.mxu0 0.0
        %960 = vmatpush1.msra.mxu0 %v882
        %961 = vmatprep.subr.mxu0 0.0
        %962 = vmatpush1.msra.mxu0 %v881
        %963 = vmatprep.subr.mxu0 0.0
        %964 = vmatpush2.msra.mxu0 0.0
        %965 = vmatprep.subr.mxu0 0.0
        %966 = vmatpush2.msra.mxu0 0.0
        %967 = vmatprep.subr.mxu0 0.0
        %968 = vmatpush2.msra.mxu0 0.0
        %969 = vmatprep.subr.mxu0 0.0
        %970 = vmatpush2.msra.mxu0 0.0
        %971 = vmatprep.subr.mxu0 0.0
        %972 = vmatpush2.msra.mxu0 0.0
        %973 = vmatprep.subr.mxu0 0.0
        %974 = vmatpush2.msra.mxu0 0.0
        %975 = vmatprep.subr.mxu0 0.0
        %976 = vmatpush2.msra.mxu0 0.0
        %977 = vmatprep.subr.mxu0 0.0
        %978 = vmatpush2.msra.mxu0 0.0
        %979 = vmatprep.subr.mxu0 0.0
        %980 = vmatpush2.msra.mxu0 0.0
        %981 = vmatprep.subr.mxu0 0.0
        %982 = vmatpush2.msra.mxu0 0.0
        %983 = vmatprep.subr.mxu0 0.0
        %984 = vmatpush2.msra.mxu0 0.0
        %985 = vmatprep.subr.mxu0 0.0
        %986 = vmatpush2.msra.mxu0 0.0
        %987 = vmatprep.subr.mxu0 0.0
        %988 = vmatpush2.msra.mxu0 0.0
        %989 = vmatprep.subr.mxu0 0.0
        %990 = vmatpush2.msra.mxu0 0.0
        %991 = vmatprep.subr.mxu0 0.0
        %992 = vmatpush2.msra.mxu0 0.0
        %993 = vmatprep.subr.mxu0 0.0
        %994 = vmatpush2.msra.mxu0 %v897
        %995 = vmatprep.mubr.f32.mxu0 %v923
        %996 = vmatmul.mubr.f32.gmra.mxu0 %v903
        %v997 = vpop.f32.mrf.mxu0
        %v998 = vadd.f32 0.0, %v997
        %v999 = vpop.f32.mrf.mxu0
        %1000 = vmatprep.mubr.f32.mxu0 %v925
        %1001 = vmatmul.mubr.f32.gmra.mxu0 %v908
        %v1002 = vpop.f32.mrf.mxu0
        %v1003 = vadd.f32 0.0, %v1002
        %v1004 = vpop.f32.mrf.mxu0
        %1005 = vmatprep.mubr.f32.mxu0 %v927
        %1006 = vmatmul.mubr.f32.gmra.mxu0 %v912
        %v1007 = vpop.f32.mrf.mxu0
        %v1008 = vadd.f32 0.0, %v1007
        %v1009 = vpop.f32.mrf.mxu0
        %1010 = vmatprep.mubr.f32.mxu0 %v929
        %1011 = vmatmul.mubr.f32.gmra.mxu0 %v916
        %v1012 = vpop.f32.mrf.mxu0
        %v1013 = vadd.f32 0.0, %v1012
        %v1014 = vpop.f32.mrf.mxu0
        %1015 = vdwg.mxu0
        %v1016 = vadd.f32 %v876, %v998
        %v1017 = vadd.f32 %v877, %v1003
        %v1018 = vadd.f32 %v878, %v1008
        %v1019 = vadd.f32 %v879, %v1013
        %s1020 = scalar_lea.vmem %s3, 272
        %v1021 = vld [vmem:[%s1020] sm:$0xff]
        %v1022 = vld [vmem:[%s1020 + $0x8] sm:$0xff]
        %v1023 = vld [vmem:[%s1020 + $0x10] sm:$0xff]
        %v1024 = vld [vmem:[%s1020 + $0x18] sm:$0xff]
        %v1025 = vld [vmem:[%s1020 + $0x20] sm:$0xff]
        %v1026 = vld [vmem:[%s1020 + $0x28] sm:$0xff]
        %v1027 = vld [vmem:[%s1020 + $0x30] sm:$0xff]
        %v1028 = vld [vmem:[%s1020 + $0x38] sm:$0xff]
        %v1029 = vld [vmem:[%s1020 + $0x40] sm:$0xff]
        %v1030 = vld [vmem:[%s1020 + $0x48] sm:$0xff]
        %v1031 = vld [vmem:[%s1020 + $0x50] sm:$0xff]
        %v1032 = vld [vmem:[%s1020 + $0x58] sm:$0xff]
        %v1033 = vld [vmem:[%s1020 + $0x60] sm:$0xff]
        %v1034 = vld [vmem:[%s1020 + $0x68] sm:$0xff]
        %v1035 = vld [vmem:[%s1020 + $0x70] sm:$0xff]
        %v1036 = vld [vmem:[%s1020 + $0x78] sm:$0xff]
        %v1037 = vld [vmem:[%s1020 + $0x80] sm:$0xff]
        %v1038 = vrot.slane %v761, 2
        %v1039 = vrot.slane %v743, 2
        %v1040 = vsel %vm584, %v1038, %v1039
        %v1041 = vrot.slane %v762, 2
        %v1042 = vrot.slane %v745, 2
        %v1043 = vsel %vm584, %v1041, %v1042
        %v1044 = vrot.slane %v747, 2
        %v1045 = vsel %vm584, %v1039, %v1044
        %v1046 = vrot.slane %v749, 2
        %v1047 = vsel %vm584, %v1042, %v1046
        %v1048 = vrot.slane %v751, 2
        %v1049 = vsel %vm584, %v1044, %v1048
        %v1050 = vrot.slane %v753, 2
        %v1051 = vsel %vm584, %v1046, %v1050
        %v1052 = vrot.slane %v763, 2
        %v1053 = vsel %vm584, %v1048, %v1052
        %v1054 = vrot.slane %v764, 2
        %v1055 = vsel %vm584, %v1050, %v1054
        %v1060 = vsel %vm379, %v1043, 0
        %v1062 = vsel %vm379, %v1047, 0
        %v1064 = vsel %vm379, %v1051, 0
        %v1066 = vsel %vm379, %v1055, 0
        %1068 = vmatprep.subr.mxu0 0.0
        %1069 = vmatpush1.msra.mxu0 %v1036
        %1070 = vmatprep.subr.mxu0 0.0
        %1071 = vmatpush1.msra.mxu0 %v1035
        %1072 = vmatprep.subr.mxu0 0.0
        %1073 = vmatpush1.msra.mxu0 %v1034
        %1074 = vmatprep.subr.mxu0 0.0
        %1075 = vmatpush1.msra.mxu0 %v1033
        %1076 = vmatprep.subr.mxu0 0.0
        %1077 = vmatpush1.msra.mxu0 %v1032
        %1078 = vmatprep.subr.mxu0 0.0
        %1079 = vmatpush1.msra.mxu0 %v1031
        %1080 = vmatprep.subr.mxu0 0.0
        %1081 = vmatpush1.msra.mxu0 %v1030
        %1082 = vmatprep.subr.mxu0 0.0
        %1083 = vmatpush1.msra.mxu0 %v1029
        %1084 = vmatprep.subr.mxu0 0.0
        %1085 = vmatpush1.msra.mxu0 %v1028
        %1086 = vmatprep.subr.mxu0 0.0
        %1087 = vmatpush1.msra.mxu0 %v1027
        %1088 = vmatprep.subr.mxu0 0.0
        %1089 = vmatpush1.msra.mxu0 %v1026
        %1090 = vmatprep.subr.mxu0 0.0
        %1091 = vmatpush1.msra.mxu0 %v1025
        %1092 = vmatprep.subr.mxu0 0.0
        %1093 = vmatpush1.msra.mxu0 %v1024
        %1094 = vmatprep.subr.mxu0 0.0
        %1095 = vmatpush1.msra.mxu0 %v1023
        %1096 = vmatprep.subr.mxu0 0.0
        %1097 = vmatpush1.msra.mxu0 %v1022
        %1098 = vmatprep.subr.mxu0 0.0
        %1099 = vmatpush1.msra.mxu0 %v1021
        %1100 = vmatprep.subr.mxu0 0.0
        %1101 = vmatpush2.msra.mxu0 0.0
        %1102 = vmatprep.subr.mxu0 0.0
        %1103 = vmatpush2.msra.mxu0 0.0
        %1104 = vmatprep.subr.mxu0 0.0
        %1105 = vmatpush2.msra.mxu0 0.0
        %1106 = vmatprep.subr.mxu0 0.0
        %1107 = vmatpush2.msra.mxu0 0.0
        %1108 = vmatprep.subr.mxu0 0.0
        %1109 = vmatpush2.msra.mxu0 0.0
        %1110 = vmatprep.subr.mxu0 0.0
        %1111 = vmatpush2.msra.mxu0 0.0
        %1112 = vmatprep.subr.mxu0 0.0
        %1113 = vmatpush2.msra.mxu0 0.0
        %1114 = vmatprep.subr.mxu0 0.0
        %1115 = vmatpush2.msra.mxu0 0.0
        %1116 = vmatprep.subr.mxu0 0.0
        %1117 = vmatpush2.msra.mxu0 0.0
        %1118 = vmatprep.subr.mxu0 0.0
        %1119 = vmatpush2.msra.mxu0 0.0
        %1120 = vmatprep.subr.mxu0 0.0
        %1121 = vmatpush2.msra.mxu0 0.0
        %1122 = vmatprep.subr.mxu0 0.0
        %1123 = vmatpush2.msra.mxu0 0.0
        %1124 = vmatprep.subr.mxu0 0.0
        %1125 = vmatpush2.msra.mxu0 0.0
        %1126 = vmatprep.subr.mxu0 0.0
        %1127 = vmatpush2.msra.mxu0 0.0
        %1128 = vmatprep.subr.mxu0 0.0
        %1129 = vmatpush2.msra.mxu0 0.0
        %1130 = vmatprep.subr.mxu0 0.0
        %1131 = vmatpush2.msra.mxu0 %v1037
        %1132 = vmatprep.mubr.f32.mxu0 %v1060
        %1133 = vmatmul.mubr.f32.gmra.mxu0 %v1040
        %v1134 = vpop.f32.mrf.mxu0
        %v1135 = vadd.f32 0.0, %v1134
        %v1136 = vpop.f32.mrf.mxu0
        %1137 = vmatprep.mubr.f32.mxu0 %v1062
        %1138 = vmatmul.mubr.f32.gmra.mxu0 %v1045
        %v1139 = vpop.f32.mrf.mxu0
        %v1140 = vadd.f32 0.0, %v1139
        %v1141 = vpop.f32.mrf.mxu0
        %1142 = vmatprep.mubr.f32.mxu0 %v1064
        %1143 = vmatmul.mubr.f32.gmra.mxu0 %v1049
        %v1144 = vpop.f32.mrf.mxu0
        %v1145 = vadd.f32 0.0, %v1144
        %v1146 = vpop.f32.mrf.mxu0
        %1147 = vmatprep.mubr.f32.mxu0 %v1066
        %1148 = vmatmul.mubr.f32.gmra.mxu0 %v1053
        %v1149 = vpop.f32.mrf.mxu0
        %v1150 = vadd.f32 0.0, %v1149
        %v1151 = vpop.f32.mrf.mxu0
        %1152 = vdwg.mxu0
        %v1153 = vadd.f32 %v1016, %v1135
        %v1154 = vadd.f32 %v1017, %v1140
        %v1155 = vadd.f32 %v1018, %v1145
        %v1156 = vadd.f32 %v1019, %v1150
        %1157 = vst [vmem:[%s233] sm:$0xff] %v1153
        %1158 = vst [vmem:[%s233 + $0x8] sm:$0xff] %v1154
        %1159 = vst [vmem:[%s233 + $0x10] sm:$0xff] %v1155
        %1160 = vst [vmem:[%s233 + $0x18] sm:$0xff] %v1156
        %v1161 = vadd.f32 %v1153, %v1154
        %v1162 = vadd.f32 %v1161, %v1155
        %v1163 = vadd.f32 %v1162, %v1156
        %v1164 = vrot.slane %v1163, 4
        %v1165 = vadd.f32 %v1163, %v1164
        %v1166 = vrot.slane %v1165, 2
        %v1167 = vadd.f32 %v1165, %v1166
        %v1168 = vrot.slane %v1167, 1
        %v1169 = vadd.f32 %v1167, %v1168
        %1170 = vst [vmem:[%s253] sm:$0x1] %v1169
        %v1171 = vmul.f32 %v1153, %v1153
        %v1172 = vmul.f32 %v1154, %v1154
        %v1173 = vmul.f32 %v1155, %v1155
        %v1174 = vmul.f32 %v1156, %v1156
        %v1175 = vadd.f32 %v1171, %v1172
        %v1176 = vadd.f32 %v1175, %v1173
        %v1177 = vadd.f32 %v1176, %v1174
        %v1178 = vrot.slane %v1177, 4
        %v1179 = vadd.f32 %v1177, %v1178
        %v1180 = vrot.slane %v1179, 2
        %v1181 = vadd.f32 %v1179, %v1180
        %v1182 = vrot.slane %v1181, 1
        %v1183 = vadd.f32 %v1181, %v1182
        %1184 = vst [vmem:[%s253 + $0x1] sm:$0x1] %v1183
        %s1185 = sand.u32 %s122, 1
        %s1186 = scalar_lea.sflag [#allocation3], %s1185
        %s1187 = sand.u32 %s122, 1
        %s1188 = smul.addr %s1187, 32
        %s1189 = scalar_lea.vmem [#allocation2], %s1188
        %p1190 = scmp.lt.s32.totalorder %s20, 1
        %s1191 = scalar_select %p1190, %s20, 1
        %s1192 = smul.addr %s1191, 2
        %s1193 = scalar_lea.vmem %s5, %s1192
        // Predicated region
        $region37: #{up_forward.3} parent=35 // pred_check
          %p1194 = pneg %p132
        $region38: #{up_forward.3} parent=35 // pred_check_branch
          %1196 = sbr.rel (%p1194) target = $region40
        $region39: #{up_forward.3} parent=35 // pred_region
          %s1198 = ssub.s32 512, 512
          %1199 = vsyncadd %s1186, %s1198
          %s1200 = smul.addr %s20, 4
          %s1201 = smul.addr %s1200, 128
          %s1202 = scalar_lea.hbm %s4, %s1201
          %s1203 = sshll.u32 %s1189, 4
          %s1204 = int_to_ptr.vmem [resolvable:$true] %s1203
          %1209 = dma.vmem_to_hbm [thread:$0]  %s1204, 512, %s1202, %s1186, 128, 128, 8
        $region40: #{up_forward.3} parent=35 // pred_fallthru
          _
        // Predicated region
        $region41: #{up_forward.3} parent=35 // pred_check
          %p1210 = pneg %p158
        $region42: #{up_forward.3} parent=35 // pred_check_branch
          %1212 = sbr.rel (%p1210) target = $region44
        $region43: #{up_forward.3} parent=35 // pred_region
          _
        $region44: #{up_forward.3} parent=35 // pred_fallthru
          _
      $region36: #{up_forward.3} parent=5 // pred_fallthru
        _
      %p1213 = scmp.le.s32.totalorder 2, %s15
      // Predicated region
      $region45: #{up_forward.3} parent=5 // pred_check
        %p1214 = pneg %p1213
      $region46: #{up_forward.3} parent=5 // pred_check_branch
        %1216 = sbr.rel (%p1214) target = $region48
      $region47: #{up_forward.3} parent=5 // pred_region
        %s1217 = ssub.s32 %s15, 2
        // Predicated region
        $region49: #{up_forward.3} parent=47 // pred_check
          %p1218 = pneg %p138
        $region50: #{up_forward.3} parent=47 // pred_check_branch
          %1220 = sbr.rel (%p1218) target = $region52
        $region51: #{up_forward.3} parent=47 // pred_region
          %s1221 = sand.u32 %s123, 1
          %s1222 = scalar_lea.sflag [#allocation3], %s1221
          %s1223 = sand.u32 %s123, 1
          %s1224 = smul.addr %s1223, 32
          %s1225 = scalar_lea.vmem [#allocation2], %s1224
          %1226 = dma.done %s1222, 512
        $region52: #{up_forward.3} parent=47 // pred_fallthru
          _
        // Predicated region
        $region53: #{up_forward.3} parent=47 // pred_check
          %p1227 = pneg %p164
        $region54: #{up_forward.3} parent=47 // pred_check_branch
          %1229 = sbr.rel (%p1227) target = $region56
        $region55: #{up_forward.3} parent=47 // pred_region
          %p1230 = scmp.lt.s32.totalorder %s21, 1
          %s1231 = scalar_select %p1230, %s21, 1
          %s1232 = smul.addr %s1231, 2
          %s1233 = scalar_lea.vmem %s5, %s1232
        $region56: #{up_forward.3} parent=47 // pred_fallthru
          _
      $region48: #{up_forward.3} parent=5 // pred_fallthru
        _
    $region6: #{up_forward.3} parent=1 // loop_footer
      %s19 = sadd.s32 1, %s15
    $region7: #{up_forward.3} parent=1 // loop_footer_branch
      %14 = sbr.rel target = $region3
    $region8: #{up_forward.3} parent=1 // loop_exit
      _
    %1234 = vsyncpa [#allocation3], 1
    %s1235 = scalar_lea.sflag [#allocation3], 1
    %1236 = vsyncpa %s1235, 1

</llo_original>
